<compile_context>
chip_gen: v7x
topology: tpu7x:2x2x1
jax: 0.10.0
libtpu: 0.0.40
codegen_flags: <defaults>
</compile_context>

<pallas_src>
import functools
import math

import jax
import jax.numpy as jnp
from jax.experimental import pallas as pl
from jax.experimental.pallas import tpu as pltpu


# Scoped-VMEM budget, safe on every generation:
#   v5e: 16 MiB scoped default / 128 MiB physical
#   v6e: 32 MiB scoped default / 128 MiB physical
#   v7x: 32 MiB scoped default /  64 MiB physical  (stay well under 64)
_VMEM_LIMIT_BYTES = 48 * 1024 * 1024


# ----------------------------------------------------------------------------
# Projection kernels (run once over the sequence; weights resident per call).
# ----------------------------------------------------------------------------
def _q_project_kernel(x_ref, w_ref, o_ref, *, scale):
    y = jnp.dot(x_ref[...], w_ref[...], preferred_element_type=jnp.float32)
    o_ref[...] = (y * scale).astype(o_ref.dtype)


def _kv_project_kernel(k_ref, v_ref, wk_ref, wv_ref, kp_ref, vp_ref):
    kp_ref[...] = jnp.dot(k_ref[...], wk_ref[...],
                          preferred_element_type=jnp.float32).astype(kp_ref.dtype)
    vp_ref[...] = jnp.dot(v_ref[...], wv_ref[...],
                          preferred_element_type=jnp.float32).astype(vp_ref.dtype)


# ----------------------------------------------------------------------------
# Flash attention over precomputed projections.
# ----------------------------------------------------------------------------
def _flash_kernel(qp_ref, kp_ref, vp_ref, o_ref, m_ref, l_ref, acc_ref, *,
                  kv_len, kv_tile, mask_kv, approx_reciprocal):
    kv = pl.program_id(1)
    last = pl.num_programs(1) - 1

    @pl.when(kv == 0)
    def _init():
        m_ref[...] = jnp.full(m_ref.shape, -jnp.inf, dtype=jnp.float32)
        l_ref[...] = jnp.zeros(l_ref.shape, dtype=jnp.float32)
        acc_ref[...] = jnp.zeros(acc_ref.shape, dtype=jnp.float32)

    # Scores: contract over qk_dim of both operands (no K transpose).
    s = jax.lax.dot_general(
        qp_ref[...], kp_ref[...],
        dimension_numbers=(((1,), (1,)), ((), ())),
        preferred_element_type=jnp.float32)

    def _update(scores):
        # Online softmax update (all f32).
        m_prev = m_ref[...]
        m_new = jnp.maximum(m_prev, jnp.max(scores, axis=-1, keepdims=True))
        alpha = jnp.exp(m_prev - m_new)
        p = jnp.exp(scores - m_new)
        l_ref[...] = alpha * l_ref[...] + jnp.sum(p, axis=-1, keepdims=True)
        acc_ref[...] = alpha * acc_ref[...] + jnp.dot(
            p.astype(vp_ref.dtype), vp_ref[...],
            preferred_element_type=jnp.float32)
        m_ref[...] = m_new

    if mask_kv:
        # Only the final kv tile contains padded key rows (padding < kv_tile),
        # so restrict the iota/compare/select to that tile; all other tiles
        # take the mask-free path at zero VPU cost.
        @pl.when(kv < last)
        def _unmasked():
            _update(s)

        @pl.when(kv == last)
        def _masked():
            pos = kv * kv_tile + jax.lax.broadcasted_iota(jnp.int32, s.shape, 1)
            _update(jnp.where(pos < kv_len, s, -1e30))
    else:
        _update(s)

    @pl.when(kv == last)
    def _finalize():
        if approx_reciprocal:
            inv_l = pl.reciprocal(l_ref[...], approx=True)
            o_ref[...] = (acc_ref[...] * inv_l).astype(o_ref.dtype)
        else:
            o_ref[...] = (acc_ref[...] / l_ref[...]).astype(o_ref.dtype)


# ----------------------------------------------------------------------------
# Host-side wrapper.
# ----------------------------------------------------------------------------
def _ceil_to(n, m):
    return -(-n // m) * m


def _balanced_tile(seq, max_tile, multiple):
    """Largest tile <= max_tile (rounded to `multiple`) that evenly splits the
    sequence into ceil(seq/max_tile) tiles -- minimizes padding waste instead
    of blindly padding seq up to a multiple of max_tile."""
    n_tiles = -(-seq // max_tile)
    t = _ceil_to(-(-seq // n_tiles), multiple)
    return max(min(t, _ceil_to(seq, multiple)), multiple)


@functools.partial(
    jax.jit,
    static_argnames=("compute_dtype", "out_dtype", "q_tile", "kv_tile",
                     "approx_reciprocal"))
def attention_head(queries, keys, values, wq, wk, wv, *,
                   compute_dtype=jnp.bfloat16, out_dtype=None,
                   q_tile=256, kv_tile=1024, approx_reciprocal=True):
    seq_q, d_model = queries.shape
    seq_kv = keys.shape[0]
    qk_dim = wq.shape[1]
    v_dim = wv.shape[1]
    cd = compute_dtype
    od = out_dtype if out_dtype is not None else queries.dtype

    # Feature dims padded to full 128-lane multiples (MXU fill, lane-dense
    # stores); zero padding leaves every matmul result unchanged.
    d_pad = _ceil_to(d_model, 128)
    qk_pad = _ceil_to(qk_dim, 128)
    v_pad = _ceil_to(v_dim, 128)

    # Balanced tiles: q on 8-sublane granularity (keeps tq as large as the
    # sequence allows, naturally yields >=2 q tiles once seq_q > q_tile so
    # both v7x TensorCores get fed); kv on 128-lane granularity (scores' lane
    # axis).  K/V tiles are narrow now (head width), so kv_tile=1024 fits
    # easily within the explicit 48 MiB VMEM budget on every generation.
    tq = _balanced_tile(seq_q, q_tile, 8)
    tk = _balanced_tile(seq_kv, kv_tile, 128)
    sq_pad = _ceil_to(seq_q, tq)
    sk_pad = _ceil_to(seq_kv, tk)

    # Pad + cast (fuses under this jit; only the cheap feature dim plus the
    # ragged last seq tile is padded).
    q_p = jnp.pad(queries, ((0, sq_pad - seq_q), (0, d_pad - d_model))).astype(cd)
    k_p = jnp.pad(keys, ((0, sk_pad - seq_kv), (0, d_pad - d_model))).astype(cd)
    v_p = jnp.pad(values, ((0, sk_pad - seq_kv), (0, d_pad - d_model))).astype(cd)
    wq_p = jnp.pad(wq, ((0, d_pad - d_model), (0, qk_pad - qk_dim))).astype(cd)
    wk_p = jnp.pad(wk, ((0, d_pad - d_model), (0, qk_pad - qk_dim))).astype(cd)
    wv_p = jnp.pad(wv, ((0, d_pad - d_model), (0, v_pad - v_dim))).astype(cd)

    cparams_1d = pltpu.CompilerParams(
        dimension_semantics=("parallel",),
        vmem_limit_bytes=_VMEM_LIMIT_BYTES)

    # --- Q projection (pre-scaled by 1/sqrt(qk_dim)), once per q row. -------
    q_proj = pl.pallas_call(
        functools.partial(_q_project_kernel, scale=1.0 / math.sqrt(qk_dim)),
        out_shape=jax.ShapeDtypeStruct((sq_pad, qk_pad), cd),
        grid_spec=pltpu.PrefetchScalarGridSpec(
            num_scalar_prefetch=0,
            grid=(sq_pad // tq,),
            in_specs=[
                pl.BlockSpec((tq, d_pad), lambda i: (i, 0)),
                pl.BlockSpec((d_pad, qk_pad), lambda i: (0, 0)),
            ],
            out_specs=pl.BlockSpec((tq, qk_pad), lambda i: (i, 0))),
        compiler_params=cparams_1d,
    )(q_p, wq_p)

    # --- K/V projections, once per kv row (fused: one stream over seq_kv). --
    tkp = math.gcd(sk_pad, 256)   # 128 or 256; keeps raw (tkp, d_pad) blocks small
    k_proj, v_proj = pl.pallas_call(
        _kv_project_kernel,
        out_shape=(jax.ShapeDtypeStruct((sk_pad, qk_pad), cd),
                   jax.ShapeDtypeStruct((sk_pad, v_pad), cd)),
        grid_spec=pltpu.PrefetchScalarGridSpec(
            num_scalar_prefetch=0,
            grid=(sk_pad // tkp,),
            in_specs=[
                pl.BlockSpec((tkp, d_pad), lambda i: (i, 0)),
                pl.BlockSpec((tkp, d_pad), lambda i: (i, 0)),
                pl.BlockSpec((d_pad, qk_pad), lambda i: (0, 0)),
                pl.BlockSpec((d_pad, v_pad), lambda i: (0, 0)),
            ],
            out_specs=[pl.BlockSpec((tkp, qk_pad), lambda i: (i, 0)),
                       pl.BlockSpec((tkp, v_pad), lambda i: (i, 0))]),
        compiler_params=cparams_1d,
    )(k_p, v_p, wk_p, wv_p)

    # --- Flash attention over the projected, head-width tensors. ------------
    flash = functools.partial(
        _flash_kernel,
        kv_len=seq_kv,
        kv_tile=tk,
        mask_kv=(sk_pad != seq_kv),
        approx_reciprocal=approx_reciprocal)

    out = pl.pallas_call(
        flash,
        out_shape=jax.ShapeDtypeStruct((sq_pad, v_pad), od),
        grid_spec=pltpu.PrefetchScalarGridSpec(
            num_scalar_prefetch=0,
            grid=(sq_pad // tq, sk_pad // tk),
            in_specs=[
                pl.BlockSpec((tq, qk_pad), lambda i, k: (i, 0)),   # Q_proj
                pl.BlockSpec((tk, qk_pad), lambda i, k: (k, 0)),   # K_proj
                pl.BlockSpec((tk, v_pad), lambda i, k: (k, 0)),    # V_proj
            ],
            out_specs=pl.BlockSpec((tq, v_pad), lambda i, k: (i, 0)),
            scratch_shapes=[
                pltpu.VMEM((tq, 1), jnp.float32),      # running max
                pltpu.VMEM((tq, 1), jnp.float32),      # running sum
                pltpu.VMEM((tq, v_pad), jnp.float32),  # output accumulator
            ]),
        compiler_params=pltpu.CompilerParams(
            dimension_semantics=("parallel", "arbitrary"),
            vmem_limit_bytes=_VMEM_LIMIT_BYTES),
    )(q_proj, k_proj, v_proj)

    return out[:seq_q, :v_dim]


# ----------------------------------------------------------------------------
# Pure-JAX reference (mirrors the kernel's compute-dtype cast points).
# ----------------------------------------------------------------------------
def _reference(queries, keys, values, wq, wk, wv, *, compute_dtype=jnp.float32):
    cd = compute_dtype
    dot = lambda a, b: jnp.dot(a.astype(cd), b.astype(cd),
                               preferred_element_type=jnp.float32)
    Q = dot(queries, wq)
    K = dot(keys, wk)
    V = dot(values, wv)
    s = dot(Q / jnp.sqrt(jnp.float32(wq.shape[1])), K.T)
    e = jnp.exp(s - jnp.max(s, axis=-1, keepdims=True))
    num = dot(e, V)
    return num / jnp.sum(e, axis=-1, keepdims=True)


if __name__ == "__main__":
    d_model, query_key_dim, values_dim = 32, 16, 16
    key = jax.random.PRNGKey(0)
    k_wq, k_wk, k_wv, k_data = jax.random.split(key, 4)

    wq = jax.random.normal(k_wq, (d_model, query_key_dim), dtype=jnp.float32)
    wk = jax.random.normal(k_wk, (d_model, query_key_dim), dtype=jnp.float32)
    wv = jax.random.normal(k_wv, (d_model, values_dim), dtype=jnp.float32)

    def make_qkv(subkey, seq):
        kq, kk, kv = jax.random.split(subkey, 3)
        return (jax.random.normal(kq, (seq, d_model), dtype=jnp.float32),
                jax.random.normal(kk, (seq, d_model), dtype=jnp.float32),
                jax.random.normal(kv, (seq, d_model), dtype=jnp.float32))

    # 1) Toy module shapes (seq=8), f32 compute path (single masked kv tile).
    q8, k8, v8 = make_qkv(jax.random.fold_in(k_data, 0), 8)
    out = jax.block_until_ready(
        attention_head(q8, k8, v8, wq, wk, wv, compute_dtype=jnp.float32))
    ref = _reference(q8, k8, v8, wq, wk, wv, compute_dtype=jnp.float32)
    assert out.shape == (8, values_dim)
    assert jnp.allclose(out, ref, atol=2e-2, rtol=2e-2), \
        float(jnp.max(jnp.abs(out - ref)))

    # 2) Non-multiple-of-8 sequence, exact (non-approx) normalization.
    q13, k13, v13 = make_qkv(jax.random.fold_in(k_data, 1), 13)
    out = jax.block_until_ready(
        attention_head(q13, k13, v13, wq, wk, wv, compute_dtype=jnp.float32,
                       approx_reciprocal=False))
    ref = _reference(q13, k13, v13, wq, wk, wv, compute_dtype=jnp.float32)
    assert out.shape == (13, values_dim)
    assert jnp.allclose(out, ref, atol=2e-2, rtol=2e-2), \
        float(jnp.max(jnp.abs(out - ref)))

    # 3) Multi-tile grid (4 q tiles x 2 kv tiles, last kv tile masked) with
    #    bf16 matmul operands and f32 accumulation.
    qL, kL, vL = make_qkv(jax.random.fold_in(k_data, 2), 1000)
    out = jax.block_until_ready(
        attention_head(qL, kL, vL, wq, wk, wv, compute_dtype=jnp.bfloat16,
                       q_tile=256, kv_tile=512))
    ref = _reference(qL, kL, vL, wq, wk, wv, compute_dtype=jnp.bfloat16)
    assert out.shape == (1000, values_dim)
    assert jnp.allclose(out, ref, atol=5e-2, rtol=5e-2), \
        float(jnp.max(jnp.abs(out - ref)))

    print("KERNEL_OK")
</pallas_src>

<mosaic_0001>
module attributes {stable_mosaic.version = 11 : i64} {
  func.func @_kv_project_kernel(%arg0: i32, %arg1: memref<128x128xf32, #tpu.memory_space<vmem>>, %arg2: memref<128x128xf32, #tpu.memory_space<vmem>>, %arg3: memref<128x128xf32, #tpu.memory_space<vmem>>, %arg4: memref<128x128xf32, #tpu.memory_space<vmem>>, %arg5: memref<128x128xf32, #tpu.memory_space<vmem>>, %arg6: memref<128x128xf32, #tpu.memory_space<vmem>>) attributes {dimension_semantics = [#tpu.dimension_semantics<parallel>], iteration_bounds = array<i64: 1>, scalar_prefetch = 0 : i64, scratch_operands = 0 : i64, tpu.core_type = #tpu.core_type<tc>, window_params = [{transform_indices = @transform_0, window_bounds = array<i64: 128, 128>}, {transform_indices = @transform_1, window_bounds = array<i64: 128, 128>}, {pipeline_mode = #tpu.pipeline_mode<synchronous>, transform_indices = @transform_2, window_bounds = array<i64: 128, 128>}, {pipeline_mode = #tpu.pipeline_mode<synchronous>, transform_indices = @transform_3, window_bounds = array<i64: 128, 128>}, {transform_indices = @transform_4, window_bounds = array<i64: 128, 128>}, {transform_indices = @transform_5, window_bounds = array<i64: 128, 128>}]} {
    %c0 = arith.constant 0 : index
    %c0_0 = arith.constant 0 : index
    %0 = vector.load %arg1[%c0, %c0_0] : memref<128x128xf32, #tpu.memory_space<vmem>>, vector<128x128xf32>
    %c0_1 = arith.constant 0 : index
    %c0_2 = arith.constant 0 : index
    %1 = vector.load %arg3[%c0_1, %c0_2] : memref<128x128xf32, #tpu.memory_space<vmem>>, vector<128x128xf32>
    %cst = arith.constant dense<0.000000e+00> : vector<128x128xf32>
    %2 = tpu.matmul %0, %1, %cst {dimension_numbers = #tpu.dot_dimension_numbers<[1], [0], [0], [1], [0, 0, 1, 1], [], []>} : vector<128x128xf32>, vector<128x128xf32>, vector<128x128xf32> -> vector<128x128xf32>
    %c0_3 = arith.constant 0 : index
    %c0_4 = arith.constant 0 : index
    %3 = vector.load %arg5[%c0_3, %c0_4] : memref<128x128xf32, #tpu.memory_space<vmem>>, vector<128x128xf32>
    tpu.vector_store %arg5[%c0_3, %c0_4], %2 {strides = array<i32>} : memref<128x128xf32, #tpu.memory_space<vmem>>, vector<128x128xf32>,
    %c0_5 = arith.constant 0 : index
    %c0_6 = arith.constant 0 : index
    %4 = vector.load %arg2[%c0_5, %c0_6] : memref<128x128xf32, #tpu.memory_space<vmem>>, vector<128x128xf32>
    %c0_7 = arith.constant 0 : index
    %c0_8 = arith.constant 0 : index
    %5 = vector.load %arg4[%c0_7, %c0_8] : memref<128x128xf32, #tpu.memory_space<vmem>>, vector<128x128xf32>
    %cst_9 = arith.constant dense<0.000000e+00> : vector<128x128xf32>
    %6 = tpu.matmul %4, %5, %cst_9 {dimension_numbers = #tpu.dot_dimension_numbers<[1], [0], [0], [1], [0, 0, 1, 1], [], []>} : vector<128x128xf32>, vector<128x128xf32>, vector<128x128xf32> -> vector<128x128xf32>
    %c0_10 = arith.constant 0 : index
    %c0_11 = arith.constant 0 : index
    %7 = vector.load %arg6[%c0_10, %c0_11] : memref<128x128xf32, #tpu.memory_space<vmem>>, vector<128x128xf32>
    tpu.vector_store %arg6[%c0_10, %c0_11], %6 {strides = array<i32>} : memref<128x128xf32, #tpu.memory_space<vmem>>, vector<128x128xf32>,
    return
  }
  func.func @transform_0(%arg0: i32) -> (i32, i32) {
    %c0_i32 = arith.constant 0 : i32
    %c0_i32_0 = arith.constant 0 : i32
    return %arg0, %c0_i32 : i32, i32
  }
  func.func @transform_1(%arg0: i32) -> (i32, i32) {
    %c0_i32 = arith.constant 0 : i32
    %c0_i32_0 = arith.constant 0 : i32
    return %arg0, %c0_i32 : i32, i32
  }
  func.func @transform_2(%arg0: i32) -> (i32, i32) {
    %c0_i32 = arith.constant 0 : i32
    %c0_i32_0 = arith.constant 0 : i32
    %c0_i32_1 = arith.constant 0 : i32
    return %c0_i32, %c0_i32_0 : i32, i32
  }
  func.func @transform_3(%arg0: i32) -> (i32, i32) {
    %c0_i32 = arith.constant 0 : i32
    %c0_i32_0 = arith.constant 0 : i32
    %c0_i32_1 = arith.constant 0 : i32
    return %c0_i32, %c0_i32_0 : i32, i32
  }
  func.func @transform_4(%arg0: i32) -> (i32, i32) {
    %c0_i32 = arith.constant 0 : i32
    %c0_i32_0 = arith.constant 0 : i32
    return %arg0, %c0_i32 : i32, i32
  }
  func.func @transform_5(%arg0: i32) -> (i32, i32) {
    %c0_i32 = arith.constant 0 : i32
    %c0_i32_0 = arith.constant 0 : i32
    return %arg0, %c0_i32 : i32, i32
  }
}

module attributes {stable_mosaic.version = 11 : i64} {
  func.func @_q_project_kernel(%arg0: i32, %arg1: memref<8x128xf32, #tpu.memory_space<vmem>>, %arg2: memref<128x128xf32, #tpu.memory_space<vmem>>, %arg3: memref<8x128xf32, #tpu.memory_space<vmem>>) attributes {dimension_semantics = [#tpu.dimension_semantics<parallel>], iteration_bounds = array<i64: 1>, scalar_prefetch = 0 : i64, scratch_operands = 0 : i64, tpu.core_type = #tpu.core_type<tc>, window_params = [{transform_indices = @transform_0, window_bounds = array<i64: 8, 128>}, {pipeline_mode = #tpu.pipeline_mode<synchronous>, transform_indices = @transform_1, window_bounds = array<i64: 128, 128>}, {transform_indices = @transform_2, window_bounds = array<i64: 8, 128>}]} {
    %c0 = arith.constant 0 : index
    %c0_0 = arith.constant 0 : index
    %0 = vector.load %arg1[%c0, %c0_0] : memref<8x128xf32, #tpu.memory_space<vmem>>, vector<8x128xf32>
    %c0_1 = arith.constant 0 : index
    %c0_2 = arith.constant 0 : index
    %1 = vector.load %arg2[%c0_1, %c0_2] : memref<128x128xf32, #tpu.memory_space<vmem>>, vector<128x128xf32>
    %cst = arith.constant dense<0.000000e+00> : vector<8x128xf32>
    %2 = tpu.matmul %0, %1, %cst {dimension_numbers = #tpu.dot_dimension_numbers<[1], [0], [0], [1], [0, 0, 1, 1], [], []>} : vector<8x128xf32>, vector<128x128xf32>, vector<8x128xf32> -> vector<8x128xf32>
    %cst_3 = arith.constant 2.500000e-01 : f32
    %3 = vector.broadcast %cst_3 : f32 to vector<8x128xf32>
    %4 = arith.mulf %2, %3 : vector<8x128xf32>
    %c0_4 = arith.constant 0 : index
    %c0_5 = arith.constant 0 : index
    %5 = vector.load %arg3[%c0_4, %c0_5] : memref<8x128xf32, #tpu.memory_space<vmem>>, vector<8x128xf32>
    tpu.vector_store %arg3[%c0_4, %c0_5], %4 {strides = array<i32>} : memref<8x128xf32, #tpu.memory_space<vmem>>, vector<8x128xf32>,
    return
  }
  func.func @transform_0(%arg0: i32) -> (i32, i32) {
    %c0_i32 = arith.constant 0 : i32
    %c0_i32_0 = arith.constant 0 : i32
    return %arg0, %c0_i32 : i32, i32
  }
  func.func @transform_1(%arg0: i32) -> (i32, i32) {
    %c0_i32 = arith.constant 0 : i32
    %c0_i32_0 = arith.constant 0 : i32
    %c0_i32_1 = arith.constant 0 : i32
    return %c0_i32, %c0_i32_0 : i32, i32
  }
  func.func @transform_2(%arg0: i32) -> (i32, i32) {
    %c0_i32 = arith.constant 0 : i32
    %c0_i32_0 = arith.constant 0 : i32
    return %arg0, %c0_i32 : i32, i32
  }
}

module attributes {stable_mosaic.version = 11 : i64} {
  func.func @_flash_kernel(%arg0: i32, %arg1: i32, %arg2: memref<8x128xf32, #tpu.memory_space<vmem>>, %arg3: memref<128x128xf32, #tpu.memory_space<vmem>>, %arg4: memref<128x128xf32, #tpu.memory_space<vmem>>, %arg5: memref<8x128xf32, #tpu.memory_space<vmem>>, %arg6: memref<8x1xf32, #tpu.memory_space<vmem>>, %arg7: memref<8x1xf32, #tpu.memory_space<vmem>>, %arg8: memref<8x128xf32, #tpu.memory_space<vmem>>) attributes {dimension_semantics = [#tpu.dimension_semantics<parallel>, #tpu.dimension_semantics<arbitrary>], iteration_bounds = array<i64: 1, 1>, scalar_prefetch = 0 : i64, scratch_operands = 3 : i64, tpu.core_type = #tpu.core_type<tc>, window_params = [{transform_indices = @transform_0, window_bounds = array<i64: 8, 128>}, {transform_indices = @transform_1, window_bounds = array<i64: 128, 128>}, {transform_indices = @transform_2, window_bounds = array<i64: 128, 128>}, {transform_indices = @transform_3, window_bounds = array<i64: 8, 128>}]} {
    %c0_i32 = arith.constant 0 : i32
    %0 = arith.cmpi eq, %arg1, %c0_i32 : i32
    %1 = arith.extui %0 : i1 to i32
    %c0_i32_0 = arith.constant 0 : i32
    %2 = arith.cmpi ne, %1, %c0_i32_0 : i32
    scf.if %2 {
      %cst_10 = arith.constant 0xFF800000 : f32
      %15 = vector.broadcast %cst_10 : f32 to vector<8x1xf32>
      %c0_11 = arith.constant 0 : index
      %c0_12 = arith.constant 0 : index
      %16 = vector.load %arg6[%c0_11, %c0_12] : memref<8x1xf32, #tpu.memory_space<vmem>>, vector<8x1xf32>
      tpu.vector_store %arg6[%c0_11, %c0_12], %15 {strides = array<i32>} : memref<8x1xf32, #tpu.memory_space<vmem>>, vector<8x1xf32>,
      %cst_13 = arith.constant 0.000000e+00 : f32
      %17 = vector.broadcast %cst_13 : f32 to vector<8x1xf32>
      %c0_14 = arith.constant 0 : index
      %c0_15 = arith.constant 0 : index
      %18 = vector.load %arg7[%c0_14, %c0_15] : memref<8x1xf32, #tpu.memory_space<vmem>>, vector<8x1xf32>
      tpu.vector_store %arg7[%c0_14, %c0_15], %17 {strides = array<i32>} : memref<8x1xf32, #tpu.memory_space<vmem>>, vector<8x1xf32>,
      %cst_16 = arith.constant 0.000000e+00 : f32
      %19 = vector.broadcast %cst_16 : f32 to vector<8x128xf32>
      %c0_17 = arith.constant 0 : index
      %c0_18 = arith.constant 0 : index
      %20 = vector.load %arg8[%c0_17, %c0_18] : memref<8x128xf32, #tpu.memory_space<vmem>>, vector<8x128xf32>
      tpu.vector_store %arg8[%c0_17, %c0_18], %19 {strides = array<i32>} : memref<8x128xf32, #tpu.memory_space<vmem>>, vector<8x128xf32>,
    } else {
    }
    %c0 = arith.constant 0 : index
    %c0_1 = arith.constant 0 : index
    %3 = vector.load %arg2[%c0, %c0_1] : memref<8x128xf32, #tpu.memory_space<vmem>>, vector<8x128xf32>
    %c0_2 = arith.constant 0 : index
    %c0_3 = arith.constant 0 : index
    %4 = vector.load %arg3[%c0_2, %c0_3] : memref<128x128xf32, #tpu.memory_space<vmem>>, vector<128x128xf32>
    %cst = arith.constant dense<0.000000e+00> : vector<8x128xf32>
    %5 = tpu.matmul %3, %4, %cst {dimension_numbers = #tpu.dot_dimension_numbers<[1], [1], [0], [0], [0, 0, 1, 0], [], []>} : vector<8x128xf32>, vector<128x128xf32>, vector<8x128xf32> -> vector<8x128xf32>
    %c0_i32_4 = arith.constant 0 : i32
    %6 = arith.cmpi slt, %arg1, %c0_i32_4 : i32
    %7 = arith.extui %6 : i1 to i32
    %c0_i32_5 = arith.constant 0 : i32
    %8 = arith.cmpi ne, %7, %c0_i32_5 : i32
    scf.if %8 {
      %c0_10 = arith.constant 0 : index
      %c0_11 = arith.constant 0 : index
      %15 = vector.load %arg6[%c0_10, %c0_11] : memref<8x1xf32, #tpu.memory_space<vmem>>, vector<8x1xf32>
      %cst_12 = arith.constant dense<0xFF800000> : vector<8xf32>
      %16 = vector.multi_reduction <maximumf>, %5, %cst_12 [1] : vector<8x128xf32> to vector<8xf32>
      %17 = vector.shape_cast %16 : vector<8xf32> to vector<8x1xf32>
      %18 = arith.maximumf %15, %17 : vector<8x1xf32>
      %19 = arith.subf %15, %18 : vector<8x1xf32>
      %20 = math.exp %19 : vector<8x1xf32>
      %21 = vector.broadcast %18 : vector<8x1xf32> to vector<8x128xf32>
      %22 = arith.subf %5, %21 : vector<8x128xf32>
      %23 = math.exp %22 : vector<8x128xf32>
      %c0_13 = arith.constant 0 : index
      %c0_14 = arith.constant 0 : index
      %24 = vector.load %arg7[%c0_13, %c0_14] : memref<8x1xf32, #tpu.memory_space<vmem>>, vector<8x1xf32>
      %25 = arith.mulf %20, %24 : vector<8x1xf32>
      %cst_15 = arith.constant dense<0.000000e+00> : vector<8xf32>
      %26 = vector.multi_reduction <add>, %23, %cst_15 [1] : vector<8x128xf32> to vector<8xf32>
      %27 = vector.shape_cast %26 : vector<8xf32> to vector<8x1xf32>
      %28 = arith.addf %25, %27 : vector<8x1xf32>
      %c0_16 = arith.constant 0 : index
      %c0_17 = arith.constant 0 : index
      %29 = vector.load %arg7[%c0_16, %c0_17] : memref<8x1xf32, #tpu.memory_space<vmem>>, vector<8x1xf32>
      tpu.vector_store %arg7[%c0_16, %c0_17], %28 {strides = array<i32>} : memref<8x1xf32, #tpu.memory_space<vmem>>, vector<8x1xf32>,
      %c0_18 = arith.constant 0 : index
      %c0_19 = arith.constant 0 : index
      %30 = vector.load %arg8[%c0_18, %c0_19] : memref<8x128xf32, #tpu.memory_space<vmem>>, vector<8x128xf32>
      %31 = vector.broadcast %20 : vector<8x1xf32> to vector<8x128xf32>
      %32 = arith.mulf %31, %30 : vector<8x128xf32>
      %c0_20 = arith.constant 0 : index
      %c0_21 = arith.constant 0 : index
      %33 = vector.load %arg4[%c0_20, %c0_21] : memref<128x128xf32, #tpu.memory_space<vmem>>, vector<128x128xf32>
      %cst_22 = arith.constant dense<0.000000e+00> : vector<8x128xf32>
      %34 = tpu.matmul %23, %33, %cst_22 {dimension_numbers = #tpu.dot_dimension_numbers<[1], [0], [0], [1], [0, 0, 1, 1], [], []>} : vector<8x128xf32>, vector<128x128xf32>, vector<8x128xf32> -> vector<8x128xf32>
      %35 = arith.addf %32, %34 : vector<8x128xf32>
      %c0_23 = arith.constant 0 : index
      %c0_24 = arith.constant 0 : index
      %36 = vector.load %arg8[%c0_23, %c0_24] : memref<8x128xf32, #tpu.memory_space<vmem>>, vector<8x128xf32>
      tpu.vector_store %arg8[%c0_23, %c0_24], %35 {strides = array<i32>} : memref<8x128xf32, #tpu.memory_space<vmem>>, vector<8x128xf32>,
      %c0_25 = arith.constant 0 : index
      %c0_26 = arith.constant 0 : index
      %37 = vector.load %arg6[%c0_25, %c0_26] : memref<8x1xf32, #tpu.memory_space<vmem>>, vector<8x1xf32>
      tpu.vector_store %arg6[%c0_25, %c0_26], %18 {strides = array<i32>} : memref<8x1xf32, #tpu.memory_space<vmem>>, vector<8x1xf32>,
    } else {
    }
    %c0_i32_6 = arith.constant 0 : i32
    %9 = arith.cmpi eq, %arg1, %c0_i32_6 : i32
    %10 = arith.extui %9 : i1 to i32
    %c0_i32_7 = arith.constant 0 : i32
    %11 = arith.cmpi ne, %10, %c0_i32_7 : i32
    scf.if %11 {
      %c128_i32 = arith.constant 128 : i32
      %15 = arith.muli %arg1, %c128_i32 : i32
      %16 = tpu.iota {dimensions = array<i32: 1>} : vector<8x128xi32>
      %17 = vector.broadcast %15 : i32 to vector<8x128xi32>
      %18 = arith.addi %17, %16 : vector<8x128xi32>
      %c8_i32 = arith.constant 8 : i32
      %19 = vector.broadcast %c8_i32 : i32 to vector<8x128xi32>
      %20 = arith.cmpi slt, %18, %19 : vector<8x128xi32>
      %cst_10 = arith.constant -1.000000e+30 : f32
      %21 = vector.broadcast %cst_10 : f32 to vector<8x128xf32>
      %22 = arith.select %20, %5, %21 : vector<8x128xi1>, vector<8x128xf32>
      %c0_11 = arith.constant 0 : index
      %c0_12 = arith.constant 0 : index
      %23 = vector.load %arg6[%c0_11, %c0_12] : memref<8x1xf32, #tpu.memory_space<vmem>>, vector<8x1xf32>
      %cst_13 = arith.constant dense<0xFF800000> : vector<8xf32>
      %24 = vector.multi_reduction <maximumf>, %22, %cst_13 [1] : vector<8x128xf32> to vector<8xf32>
      %25 = vector.shape_cast %24 : vector<8xf32> to vector<8x1xf32>
      %26 = arith.maximumf %23, %25 : vector<8x1xf32>
      %27 = arith.subf %23, %26 : vector<8x1xf32>
      %28 = math.exp %27 : vector<8x1xf32>
      %29 = vector.broadcast %26 : vector<8x1xf32> to vector<8x128xf32>
      %30 = arith.subf %22, %29 : vector<8x128xf32>
      %31 = math.exp %30 : vector<8x128xf32>
      %c0_14 = arith.constant 0 : index
      %c0_15 = arith.constant 0 : index
      %32 = vector.load %arg7[%c0_14, %c0_15] : memref<8x1xf32, #tpu.memory_space<vmem>>, vector<8x1xf32>
      %33 = arith.mulf %28, %32 : vector<8x1xf32>
      %cst_16 = arith.constant dense<0.000000e+00> : vector<8xf32>
      %34 = vector.multi_reduction <add>, %31, %cst_16 [1] : vector<8x128xf32> to vector<8xf32>
      %35 = vector.shape_cast %34 : vector<8xf32> to vector<8x1xf32>
      %36 = arith.addf %33, %35 : vector<8x1xf32>
      %c0_17 = arith.constant 0 : index
      %c0_18 = arith.constant 0 : index
      %37 = vector.load %arg7[%c0_17, %c0_18] : memref<8x1xf32, #tpu.memory_space<vmem>>, vector<8x1xf32>
      tpu.vector_store %arg7[%c0_17, %c0_18], %36 {strides = array<i32>} : memref<8x1xf32, #tpu.memory_space<vmem>>, vector<8x1xf32>,
      %c0_19 = arith.constant 0 : index
      %c0_20 = arith.constant 0 : index
      %38 = vector.load %arg8[%c0_19, %c0_20] : memref<8x128xf32, #tpu.memory_space<vmem>>, vector<8x128xf32>
      %39 = vector.broadcast %28 : vector<8x1xf32> to vector<8x128xf32>
      %40 = arith.mulf %39, %38 : vector<8x128xf32>
      %c0_21 = arith.constant 0 : index
      %c0_22 = arith.constant 0 : index
      %41 = vector.load %arg4[%c0_21, %c0_22] : memref<128x128xf32, #tpu.memory_space<vmem>>, vector<128x128xf32>
      %cst_23 = arith.constant dense<0.000000e+00> : vector<8x128xf32>
      %42 = tpu.matmul %31, %41, %cst_23 {dimension_numbers = #tpu.dot_dimension_numbers<[1], [0], [0], [1], [0, 0, 1, 1], [], []>} : vector<8x128xf32>, vector<128x128xf32>, vector<8x128xf32> -> vector<8x128xf32>
      %43 = arith.addf %40, %42 : vector<8x128xf32>
      %c0_24 = arith.constant 0 : index
      %c0_25 = arith.constant 0 : index
      %44 = vector.load %arg8[%c0_24, %c0_25] : memref<8x128xf32, #tpu.memory_space<vmem>>, vector<8x128xf32>
      tpu.vector_store %arg8[%c0_24, %c0_25], %43 {strides = array<i32>} : memref<8x128xf32, #tpu.memory_space<vmem>>, vector<8x128xf32>,
      %c0_26 = arith.constant 0 : index
      %c0_27 = arith.constant 0 : index
      %45 = vector.load %arg6[%c0_26, %c0_27] : memref<8x1xf32, #tpu.memory_space<vmem>>, vector<8x1xf32>
      tpu.vector_store %arg6[%c0_26, %c0_27], %26 {strides = array<i32>} : memref<8x1xf32, #tpu.memory_space<vmem>>, vector<8x1xf32>,
    } else {
    }
    %c0_i32_8 = arith.constant 0 : i32
    %12 = arith.cmpi eq, %arg1, %c0_i32_8 : i32
    %13 = arith.extui %12 : i1 to i32
    %c0_i32_9 = arith.constant 0 : i32
    %14 = arith.cmpi ne, %13, %c0_i32_9 : i32
    scf.if %14 {
      %c0_10 = arith.constant 0 : index
      %c0_11 = arith.constant 0 : index
      %15 = vector.load %arg7[%c0_10, %c0_11] : memref<8x1xf32, #tpu.memory_space<vmem>>, vector<8x1xf32>
      %16 = tpu.reciprocal %15 {approx = true} : vector<8x1xf32> -> vector<8x1xf32>
      %c0_12 = arith.constant 0 : index
      %c0_13 = arith.constant 0 : index
      %17 = vector.load %arg8[%c0_12, %c0_13] : memref<8x128xf32, #tpu.memory_space<vmem>>, vector<8x128xf32>
      %18 = vector.broadcast %16 : vector<8x1xf32> to vector<8x128xf32>
      %19 = arith.mulf %17, %18 : vector<8x128xf32>
      %c0_14 = arith.constant 0 : index
      %c0_15 = arith.constant 0 : index
      %20 = vector.load %arg5[%c0_14, %c0_15] : memref<8x128xf32, #tpu.memory_space<vmem>>, vector<8x128xf32>
      tpu.vector_store %arg5[%c0_14, %c0_15], %19 {strides = array<i32>} : memref<8x128xf32, #tpu.memory_space<vmem>>, vector<8x128xf32>,
    } else {
    }
    return
  }
  func.func @transform_0(%arg0: i32, %arg1: i32) -> (i32, i32) {
    %c0_i32 = arith.constant 0 : i32
    %c0_i32_0 = arith.constant 0 : i32
    return %arg0, %c0_i32 : i32, i32
  }
  func.func @transform_1(%arg0: i32, %arg1: i32) -> (i32, i32) {
    %c0_i32 = arith.constant 0 : i32
    %c0_i32_0 = arith.constant 0 : i32
    return %arg1, %c0_i32 : i32, i32
  }
  func.func @transform_2(%arg0: i32, %arg1: i32) -> (i32, i32) {
    %c0_i32 = arith.constant 0 : i32
    %c0_i32_0 = arith.constant 0 : i32
    return %arg1, %c0_i32 : i32, i32
  }
  func.func @transform_3(%arg0: i32, %arg1: i32) -> (i32, i32) {
    %c0_i32 = arith.constant 0 : i32
    %c0_i32_0 = arith.constant 0 : i32
    return %arg0, %c0_i32 : i32, i32
  }
}

</mosaic_0001>

<llo_original>
// kernel: attention_head.3
$region0: #{attention_head.3}
  #allocation0 [shape = 'u32[]', space=smem, size = 0x4, offset = 0x4, fixed_abs, tag = 'smem constant byte address 0x4 - core index']
  #allocation1 [shape = 'u32[144,128]{1,0:T(1,128)}', space=vmem, size = 0x12000, scoped, tag = 'internal scratch']
  %s0 = inlined_call_operand.vmem [shape: f32[8,128], index: 0, kind: input, shape index: {}]
  %s1 = inlined_call_operand.vmem [shape: f32[128,128], index: 1, kind: input, shape index: {}]
  %s2 = inlined_call_operand.vmem [shape: f32[8,128], index: 2, kind: output, shape index: {}]
  %s3 = sld [smem:[#allocation0]]
  $region18: #{attention_head.3} parent=0
    _
  %s5 = ssub.s32 1, %s3
  %s6 = scalar_select 0, %s5, %s3
  // Predicated region
  $region2: #{attention_head.3} parent=0 // pred_check
    _
  $region3: #{attention_head.3} parent=0 // pred_check_branch
    %8 = sbr.rel (0) target = $region5
  $region4: #{attention_head.3} parent=0 // pred_region
    _
  $region5: #{attention_head.3} parent=0 // pred_fallthru
    _
  // Predicated region
  $region6: #{attention_head.3} parent=0 // pred_check
    _
  $region7: #{attention_head.3} parent=0 // pred_check_branch
    %10 = sbr.rel (0) target = $region9
  $region8: #{attention_head.3} parent=0 // pred_region
    _
  $region9: #{attention_head.3} parent=0 // pred_fallthru
    _
  %v11 = vld [vmem:[%s0] sm:$0xff]
  %v12 = vld [vmem:[%s1] sm:$0xff]
  %v13 = vld [vmem:[%s1 + $0x8] sm:$0xff]
  %v14 = vld [vmem:[%s1 + $0x10] sm:$0xff]
  %v15 = vld [vmem:[%s1 + $0x18] sm:$0xff]
  %v16 = vld [vmem:[%s1 + $0x20] sm:$0xff]
  %v17 = vld [vmem:[%s1 + $0x28] sm:$0xff]
  %v18 = vld [vmem:[%s1 + $0x30] sm:$0xff]
  %v19 = vld [vmem:[%s1 + $0x38] sm:$0xff]
  %v20 = vld [vmem:[%s1 + $0x40] sm:$0xff]
  %v21 = vld [vmem:[%s1 + $0x48] sm:$0xff]
  %v22 = vld [vmem:[%s1 + $0x50] sm:$0xff]
  %v23 = vld [vmem:[%s1 + $0x58] sm:$0xff]
  %v24 = vld [vmem:[%s1 + $0x60] sm:$0xff]
  %v25 = vld [vmem:[%s1 + $0x68] sm:$0xff]
  %v26 = vld [vmem:[%s1 + $0x70] sm:$0xff]
  %v27 = vld [vmem:[%s1 + $0x78] sm:$0xff]
  %28 = vmatprep.subr.mxu0 0.0
  %29 = vmatpush1.msra.mxu0 %v12
  %30 = vmatprep.subr.mxu0 0.0
  %31 = vmatpush1.msra.mxu0 %v13
  %32 = vmatprep.subr.mxu0 0.0
  %33 = vmatpush1.msra.mxu0 %v14
  %34 = vmatprep.subr.mxu0 0.0
  %35 = vmatpush1.msra.mxu0 %v15
  %36 = vmatprep.subr.mxu0 0.0
  %37 = vmatpush1.msra.mxu0 %v16
  %38 = vmatprep.subr.mxu0 0.0
  %39 = vmatpush1.msra.mxu0 %v17
  %40 = vmatprep.subr.mxu0 0.0
  %41 = vmatpush1.msra.mxu0 %v18
  %42 = vmatprep.subr.mxu0 0.0
  %43 = vmatpush1.msra.mxu0 %v19
  %44 = vmatprep.subr.mxu0 0.0
  %45 = vmatpush1.msra.mxu0 %v20
  %46 = vmatprep.subr.mxu0 0.0
  %47 = vmatpush1.msra.mxu0 %v21
  %48 = vmatprep.subr.mxu0 0.0
  %49 = vmatpush1.msra.mxu0 %v22
  %50 = vmatprep.subr.mxu0 0.0
  %51 = vmatpush1.msra.mxu0 %v23
  %52 = vmatprep.subr.mxu0 0.0
  %53 = vmatpush1.msra.mxu0 %v24
  %54 = vmatprep.subr.mxu0 0.0
  %55 = vmatpush1.msra.mxu0 %v25
  %56 = vmatprep.subr.mxu0 0.0
  %57 = vmatpush1.msra.mxu0 %v26
  %58 = vmatprep.subr.mxu0 0.0
  %59 = vmatpush1.msra.mxu0 %v27
  %60 = vmatprep.subr.mxu0 0.0
  %61 = vmatpush1.msra.mxu0 0.0
  %62 = vmatprep.subr.mxu0 0.0
  %63 = vmatpush1.msra.mxu0 0.0
  %64 = vmatprep.subr.mxu0 0.0
  %65 = vmatpush1.msra.mxu0 0.0
  %66 = vmatprep.subr.mxu0 0.0
  %67 = vmatpush1.msra.mxu0 0.0
  %68 = vmatprep.subr.mxu0 0.0
  %69 = vmatpush1.msra.mxu0 0.0
  %70 = vmatprep.subr.mxu0 0.0
  %71 = vmatpush1.msra.mxu0 0.0
  %72 = vmatprep.subr.mxu0 0.0
  %73 = vmatpush1.msra.mxu0 0.0
  %74 = vmatprep.subr.mxu0 0.0
  %75 = vmatpush1.msra.mxu0 0.0
  %76 = vmatprep.subr.mxu0 0.0
  %77 = vmatpush1.msra.mxu0 0.0
  %78 = vmatprep.subr.mxu0 0.0
  %79 = vmatpush1.msra.mxu0 0.0
  %80 = vmatprep.subr.mxu0 0.0
  %81 = vmatpush1.msra.mxu0 0.0
  %82 = vmatprep.subr.mxu0 0.0
  %83 = vmatpush1.msra.mxu0 0.0
  %84 = vmatprep.subr.mxu0 0.0
  %85 = vmatpush1.msra.mxu0 0.0
  %86 = vmatprep.subr.mxu0 0.0
  %87 = vmatpush1.msra.mxu0 0.0
  %88 = vmatprep.subr.mxu0 0.0
  %89 = vmatpush1.msra.mxu0 0.0
  %90 = vmatprep.subr.mxu0 0.0
  %91 = vmatpush1.msra.mxu0 0.0
  %92 = vmatprep.mubr.f32.mxu0 0.0
  %93 = vmatmul.mubr.f32.gmra.mrb[0].mxu0 %v11
  %v94 = vpop.f32.mrb[0].mxu0
  %v95 = vadd.f32 0.0, %v94
  %v96 = vpop.f32.mrb[0].mxu0
  %97 = vdwg.mxu0
  %v98 = vmul.f32 %v95, 0.25
  %99 = vst [vmem:[%s2] sm:$0xff] %v98
  // Predicated region
  $region10: #{attention_head.3} parent=0 // pred_check
    _
  $region11: #{attention_head.3} parent=0 // pred_check_branch
    %101 = sbr.rel (0) target = $region13
  $region12: #{attention_head.3} parent=0 // pred_region
    _
  $region13: #{attention_head.3} parent=0 // pred_fallthru
    _
  // Predicated region
  $region14: #{attention_head.3} parent=0 // pred_check
    _
  $region15: #{attention_head.3} parent=0 // pred_check_branch
    %103 = sbr.rel (0) target = $region17
  $region16: #{attention_head.3} parent=0 // pred_region
    _
  $region17: #{attention_head.3} parent=0 // pred_fallthru
    _

// kernel: attention_head.4
$region0: #{attention_head.4}
  #allocation0 [shape = 'u32[]', space=smem, size = 0x4, offset = 0x4, fixed_abs, tag = 'smem constant byte address 0x4 - core index']
  #allocation1 [shape = 'u32[144,128]{1,0:T(1,128)}', space=vmem, size = 0x12000, scoped, tag = 'internal scratch']
  %s0 = inlined_call_operand.vmem [shape: f32[128,128], index: 0, kind: input, shape index: {}]
  %s1 = inlined_call_operand.vmem [shape: f32[128,128], index: 1, kind: input, shape index: {}]
  %s2 = inlined_call_operand.vmem [shape: f32[128,128], index: 2, kind: input, shape index: {}]
  %s3 = inlined_call_operand.vmem [shape: f32[128,128], index: 3, kind: input, shape index: {}]
  %s4 = inlined_call_operand.vmem [shape: f32[128,128], index: 4, kind: output, shape index: {0}]
  %s5 = inlined_call_operand.vmem [shape: f32[128,128], index: 5, kind: output, shape index: {1}]
  %6 = xla_tuple %s4, %s5
  %s7 = sld [smem:[#allocation0]]
  $region34: #{attention_head.4} parent=0
    _
  %s9 = ssub.s32 1, %s7
  %s10 = scalar_select 0, %s9, %s7
  // Predicated region
  $region2: #{attention_head.4} parent=0 // pred_check
    _
  $region3: #{attention_head.4} parent=0 // pred_check_branch
    %12 = sbr.rel (0) target = $region5
  $region4: #{attention_head.4} parent=0 // pred_region
    _
  $region5: #{attention_head.4} parent=0 // pred_fallthru
    _
  // Predicated region
  $region6: #{attention_head.4} parent=0 // pred_check
    _
  $region7: #{attention_head.4} parent=0 // pred_check_branch
    %14 = sbr.rel (0) target = $region9
  $region8: #{attention_head.4} parent=0 // pred_region
    _
  $region9: #{attention_head.4} parent=0 // pred_fallthru
    _
  // Predicated region
  $region10: #{attention_head.4} parent=0 // pred_check
    _
  $region11: #{attention_head.4} parent=0 // pred_check_branch
    %16 = sbr.rel (0) target = $region13
  $region12: #{attention_head.4} parent=0 // pred_region
    _
  $region13: #{attention_head.4} parent=0 // pred_fallthru
    _
  // Predicated region
  $region14: #{attention_head.4} parent=0 // pred_check
    _
  $region15: #{attention_head.4} parent=0 // pred_check_branch
    %18 = sbr.rel (0) target = $region17
  $region16: #{attention_head.4} parent=0 // pred_region
    _
  $region17: #{attention_head.4} parent=0 // pred_fallthru
    _
  %v19 = vld [vmem:[%s0] sm:$0xff]
  %v20 = vld [vmem:[%s0 + $0x8] sm:$0xff]
  %v21 = vld [vmem:[%s0 + $0x10] sm:$0xff]
  %v22 = vld [vmem:[%s0 + $0x18] sm:$0xff]
  %v23 = vld [vmem:[%s0 + $0x20] sm:$0xff]
  %v24 = vld [vmem:[%s0 + $0x28] sm:$0xff]
  %v25 = vld [vmem:[%s0 + $0x30] sm:$0xff]
  %v26 = vld [vmem:[%s0 + $0x38] sm:$0xff]
  %v27 = vld [vmem:[%s0 + $0x40] sm:$0xff]
  %v28 = vld [vmem:[%s0 + $0x48] sm:$0xff]
  %v29 = vld [vmem:[%s0 + $0x50] sm:$0xff]
  %v30 = vld [vmem:[%s0 + $0x58] sm:$0xff]
  %v31 = vld [vmem:[%s0 + $0x60] sm:$0xff]
  %v32 = vld [vmem:[%s0 + $0x68] sm:$0xff]
  %v33 = vld [vmem:[%s0 + $0x70] sm:$0xff]
  %v34 = vld [vmem:[%s0 + $0x78] sm:$0xff]
  %v35 = vld [vmem:[%s2] sm:$0xff]
  %v36 = vld [vmem:[%s2 + $0x8] sm:$0xff]
  %v37 = vld [vmem:[%s2 + $0x10] sm:$0xff]
  %v38 = vld [vmem:[%s2 + $0x18] sm:$0xff]
  %v39 = vld [vmem:[%s2 + $0x20] sm:$0xff]
  %v40 = vld [vmem:[%s2 + $0x28] sm:$0xff]
  %v41 = vld [vmem:[%s2 + $0x30] sm:$0xff]
  %v42 = vld [vmem:[%s2 + $0x38] sm:$0xff]
  %v43 = vld [vmem:[%s2 + $0x40] sm:$0xff]
  %v44 = vld [vmem:[%s2 + $0x48] sm:$0xff]
  %v45 = vld [vmem:[%s2 + $0x50] sm:$0xff]
  %v46 = vld [vmem:[%s2 + $0x58] sm:$0xff]
  %v47 = vld [vmem:[%s2 + $0x60] sm:$0xff]
  %v48 = vld [vmem:[%s2 + $0x68] sm:$0xff]
  %v49 = vld [vmem:[%s2 + $0x70] sm:$0xff]
  %v50 = vld [vmem:[%s2 + $0x78] sm:$0xff]
  %51 = vmatprep.subr.mxu0 0.0
  %52 = vmatpush1.msra.mxu0 %v35
  %53 = vmatprep.subr.mxu0 0.0
  %54 = vmatpush1.msra.mxu0 %v36
  %55 = vmatprep.subr.mxu0 0.0
  %56 = vmatpush1.msra.mxu0 %v37
  %57 = vmatprep.subr.mxu0 0.0
  %58 = vmatpush1.msra.mxu0 %v38
  %59 = vmatprep.subr.mxu0 0.0
  %60 = vmatpush1.msra.mxu0 %v39
  %61 = vmatprep.subr.mxu0 0.0
  %62 = vmatpush1.msra.mxu0 %v40
  %63 = vmatprep.subr.mxu0 0.0
  %64 = vmatpush1.msra.mxu0 %v41
  %65 = vmatprep.subr.mxu0 0.0
  %66 = vmatpush1.msra.mxu0 %v42
  %67 = vmatprep.subr.mxu0 0.0
  %68 = vmatpush1.msra.mxu0 %v43
  %69 = vmatprep.subr.mxu0 0.0
  %70 = vmatpush1.msra.mxu0 %v44
  %71 = vmatprep.subr.mxu0 0.0
  %72 = vmatpush1.msra.mxu0 %v45
  %73 = vmatprep.subr.mxu0 0.0
  %74 = vmatpush1.msra.mxu0 %v46
  %75 = vmatprep.subr.mxu0 0.0
  %76 = vmatpush1.msra.mxu0 %v47
  %77 = vmatprep.subr.mxu0 0.0
  %78 = vmatpush1.msra.mxu0 %v48
  %79 = vmatprep.subr.mxu0 0.0
  %80 = vmatpush1.msra.mxu0 %v49
  %81 = vmatprep.subr.mxu0 0.0
  %82 = vmatpush1.msra.mxu0 %v50
  %83 = vmatprep.subr.mxu0 0.0
  %84 = vmatpush1.msra.mxu0 0.0
  %85 = vmatprep.subr.mxu0 0.0
  %86 = vmatpush1.msra.mxu0 0.0
  %87 = vmatprep.subr.mxu0 0.0
  %88 = vmatpush1.msra.mxu0 0.0
  %89 = vmatprep.subr.mxu0 0.0
  %90 = vmatpush1.msra.mxu0 0.0
  %91 = vmatprep.subr.mxu0 0.0
  %92 = vmatpush1.msra.mxu0 0.0
  %93 = vmatprep.subr.mxu0 0.0
  %94 = vmatpush1.msra.mxu0 0.0
  %95 = vmatprep.subr.mxu0 0.0
  %96 = vmatpush1.msra.mxu0 0.0
  %97 = vmatprep.subr.mxu0 0.0
  %98 = vmatpush1.msra.mxu0 0.0
  %99 = vmatprep.subr.mxu0 0.0
  %100 = vmatpush1.msra.mxu0 0.0
  %101 = vmatprep.subr.mxu0 0.0
  %102 = vmatpush1.msra.mxu0 0.0
  %103 = vmatprep.subr.mxu0 0.0
  %104 = vmatpush1.msra.mxu0 0.0
  %105 = vmatprep.subr.mxu0 0.0
  %106 = vmatpush1.msra.mxu0 0.0
  %107 = vmatprep.subr.mxu0 0.0
  %108 = vmatpush1.msra.mxu0 0.0
  %109 = vmatprep.subr.mxu0 0.0
  %110 = vmatpush1.msra.mxu0 0.0
  %111 = vmatprep.subr.mxu0 0.0
  %112 = vmatpush1.msra.mxu0 0.0
  %113 = vmatprep.subr.mxu0 0.0
  %114 = vmatpush1.msra.mxu0 0.0
  %115 = vmatprep.mubr.f32.mxu0 0.0
  %116 = vmatmul.mubr.f32.gmra.mrb[0].mxu0 %v19
  %v117 = vpop.f32.mrb[0].mxu0
  %v118 = vadd.f32 0.0, %v117
  %v119 = vpop.f32.mrb[0].mxu0
  %120 = vmatprep.mubr.f32.mxu0 0.0
  %121 = vmatmul.mubr.f32.gmra.mrb[0].mxu0 %v20
  %v122 = vpop.f32.mrb[0].mxu0
  %v123 = vadd.f32 0.0, %v122
  %v124 = vpop.f32.mrb[0].mxu0
  %125 = vmatprep.mubr.f32.mxu0 0.0
  %126 = vmatmul.mubr.f32.gmra.mrb[0].mxu0 %v21
  %v127 = vpop.f32.mrb[0].mxu0
  %v128 = vadd.f32 0.0, %v127
  %v129 = vpop.f32.mrb[0].mxu0
  %130 = vmatprep.mubr.f32.mxu0 0.0
  %131 = vmatmul.mubr.f32.gmra.mrb[0].mxu0 %v22
  %v132 = vpop.f32.mrb[0].mxu0
  %v133 = vadd.f32 0.0, %v132
  %v134 = vpop.f32.mrb[0].mxu0
  %135 = vmatprep.mubr.f32.mxu0 0.0
  %136 = vmatmul.mubr.f32.gmra.mrb[0].mxu0 %v23
  %v137 = vpop.f32.mrb[0].mxu0
  %v138 = vadd.f32 0.0, %v137
  %v139 = vpop.f32.mrb[0].mxu0
  %140 = vmatprep.mubr.f32.mxu0 0.0
  %141 = vmatmul.mubr.f32.gmra.mrb[0].mxu0 %v24
  %v142 = vpop.f32.mrb[0].mxu0
  %v143 = vadd.f32 0.0, %v142
  %v144 = vpop.f32.mrb[0].mxu0
  %145 = vmatprep.mubr.f32.mxu0 0.0
  %146 = vmatmul.mubr.f32.gmra.mrb[0].mxu0 %v25
  %v147 = vpop.f32.mrb[0].mxu0
  %v148 = vadd.f32 0.0, %v147
  %v149 = vpop.f32.mrb[0].mxu0
  %150 = vmatprep.mubr.f32.mxu0 0.0
  %151 = vmatmul.mubr.f32.gmra.mrb[0].mxu0 %v26
  %v152 = vpop.f32.mrb[0].mxu0
  %v153 = vadd.f32 0.0, %v152
  %v154 = vpop.f32.mrb[0].mxu0
  %155 = vmatprep.mubr.f32.mxu0 0.0
  %156 = vmatmul.mubr.f32.gmra.mrb[0].mxu0 %v27
  %v157 = vpop.f32.mrb[0].mxu0
  %v158 = vadd.f32 0.0, %v157
  %v159 = vpop.f32.mrb[0].mxu0
  %160 = vmatprep.mubr.f32.mxu0 0.0
  %161 = vmatmul.mubr.f32.gmra.mrb[0].mxu0 %v28
  %v162 = vpop.f32.mrb[0].mxu0
  %v163 = vadd.f32 0.0, %v162
  %v164 = vpop.f32.mrb[0].mxu0
  %165 = vmatprep.mubr.f32.mxu0 0.0
  %166 = vmatmul.mubr.f32.gmra.mrb[0].mxu0 %v29
  %v167 = vpop.f32.mrb[0].mxu0
  %v168 = vadd.f32 0.0, %v167
  %v169 = vpop.f32.mrb[0].mxu0
  %170 = vmatprep.mubr.f32.mxu0 0.0
  %171 = vmatmul.mubr.f32.gmra.mrb[0].mxu0 %v30
  %v172 = vpop.f32.mrb[0].mxu0
  %v173 = vadd.f32 0.0, %v172
  %v174 = vpop.f32.mrb[0].mxu0
  %175 = vmatprep.mubr.f32.mxu0 0.0
  %176 = vmatmul.mubr.f32.gmra.mrb[0].mxu0 %v31
  %v177 = vpop.f32.mrb[0].mxu0
  %v178 = vadd.f32 0.0, %v177
  %v179 = vpop.f32.mrb[0].mxu0
  %180 = vmatprep.mubr.f32.mxu0 0.0
  %181 = vmatmul.mubr.f32.gmra.mrb[0].mxu0 %v32
  %v182 = vpop.f32.mrb[0].mxu0
  %v183 = vadd.f32 0.0, %v182
  %v184 = vpop.f32.mrb[0].mxu0
  %185 = vmatprep.mubr.f32.mxu0 0.0
  %186 = vmatmul.mubr.f32.gmra.mrb[0].mxu0 %v33
  %v187 = vpop.f32.mrb[0].mxu0
  %v188 = vadd.f32 0.0, %v187
  %v189 = vpop.f32.mrb[0].mxu0
  %190 = vmatprep.mubr.f32.mxu0 0.0
  %191 = vmatmul.mubr.f32.gmra.mrb[0].mxu0 %v34
  %v192 = vpop.f32.mrb[0].mxu0
  %v193 = vadd.f32 0.0, %v192
  %v194 = vpop.f32.mrb[0].mxu0
  %195 = vdwg.mxu0
  %196 = vst [vmem:[%s4] sm:$0xff] %v118
  %197 = vst [vmem:[%s4 + $0x8] sm:$0xff] %v123
  %198 = vst [vmem:[%s4 + $0x10] sm:$0xff] %v128
  %199 = vst [vmem:[%s4 + $0x18] sm:$0xff] %v133
  %200 = vst [vmem:[%s4 + $0x20] sm:$0xff] %v138
  %201 = vst [vmem:[%s4 + $0x28] sm:$0xff] %v143
  %202 = vst [vmem:[%s4 + $0x30] sm:$0xff] %v148
  %203 = vst [vmem:[%s4 + $0x38] sm:$0xff] %v153
  %204 = vst [vmem:[%s4 + $0x40] sm:$0xff] %v158
  %205 = vst [vmem:[%s4 + $0x48] sm:$0xff] %v163
  %206 = vst [vmem:[%s4 + $0x50] sm:$0xff] %v168
  %207 = vst [vmem:[%s4 + $0x58] sm:$0xff] %v173
  %208 = vst [vmem:[%s4 + $0x60] sm:$0xff] %v178
  %209 = vst [vmem:[%s4 + $0x68] sm:$0xff] %v183
  %210 = vst [vmem:[%s4 + $0x70] sm:$0xff] %v188
  %211 = vst [vmem:[%s4 + $0x78] sm:$0xff] %v193
  %v212 = vld [vmem:[%s1] sm:$0xff]
  %v213 = vld [vmem:[%s1 + $0x8] sm:$0xff]
  %v214 = vld [vmem:[%s1 + $0x10] sm:$0xff]
  %v215 = vld [vmem:[%s1 + $0x18] sm:$0xff]
  %v216 = vld [vmem:[%s1 + $0x20] sm:$0xff]
  %v217 = vld [vmem:[%s1 + $0x28] sm:$0xff]
  %v218 = vld [vmem:[%s1 + $0x30] sm:$0xff]
  %v219 = vld [vmem:[%s1 + $0x38] sm:$0xff]
  %v220 = vld [vmem:[%s1 + $0x40] sm:$0xff]
  %v221 = vld [vmem:[%s1 + $0x48] sm:$0xff]
  %v222 = vld [vmem:[%s1 + $0x50] sm:$0xff]
  %v223 = vld [vmem:[%s1 + $0x58] sm:$0xff]
  %v224 = vld [vmem:[%s1 + $0x60] sm:$0xff]
  %v225 = vld [vmem:[%s1 + $0x68] sm:$0xff]
  %v226 = vld [vmem:[%s1 + $0x70] sm:$0xff]
  %v227 = vld [vmem:[%s1 + $0x78] sm:$0xff]
  %v228 = vld [vmem:[%s3] sm:$0xff]
  %v229 = vld [vmem:[%s3 + $0x8] sm:$0xff]
  %v230 = vld [vmem:[%s3 + $0x10] sm:$0xff]
  %v231 = vld [vmem:[%s3 + $0x18] sm:$0xff]
  %v232 = vld [vmem:[%s3 + $0x20] sm:$0xff]
  %v233 = vld [vmem:[%s3 + $0x28] sm:$0xff]
  %v234 = vld [vmem:[%s3 + $0x30] sm:$0xff]
  %v235 = vld [vmem:[%s3 + $0x38] sm:$0xff]
  %v236 = vld [vmem:[%s3 + $0x40] sm:$0xff]
  %v237 = vld [vmem:[%s3 + $0x48] sm:$0xff]
  %v238 = vld [vmem:[%s3 + $0x50] sm:$0xff]
  %v239 = vld [vmem:[%s3 + $0x58] sm:$0xff]
  %v240 = vld [vmem:[%s3 + $0x60] sm:$0xff]
  %v241 = vld [vmem:[%s3 + $0x68] sm:$0xff]
  %v242 = vld [vmem:[%s3 + $0x70] sm:$0xff]
  %v243 = vld [vmem:[%s3 + $0x78] sm:$0xff]
  %244 = vmatprep.subr.mxu0 0.0
  %245 = vmatpush1.msra.mxu0 %v228
  %246 = vmatprep.subr.mxu0 0.0
  %247 = vmatpush1.msra.mxu0 %v229
  %248 = vmatprep.subr.mxu0 0.0
  %249 = vmatpush1.msra.mxu0 %v230
  %250 = vmatprep.subr.mxu0 0.0
  %251 = vmatpush1.msra.mxu0 %v231
  %252 = vmatprep.subr.mxu0 0.0
  %253 = vmatpush1.msra.mxu0 %v232
  %254 = vmatprep.subr.mxu0 0.0
  %255 = vmatpush1.msra.mxu0 %v233
  %256 = vmatprep.subr.mxu0 0.0
  %257 = vmatpush1.msra.mxu0 %v234
  %258 = vmatprep.subr.mxu0 0.0
  %259 = vmatpush1.msra.mxu0 %v235
  %260 = vmatprep.subr.mxu0 0.0
  %261 = vmatpush1.msra.mxu0 %v236
  %262 = vmatprep.subr.mxu0 0.0
  %263 = vmatpush1.msra.mxu0 %v237
  %264 = vmatprep.subr.mxu0 0.0
  %265 = vmatpush1.msra.mxu0 %v238
  %266 = vmatprep.subr.mxu0 0.0
  %267 = vmatpush1.msra.mxu0 %v239
  %268 = vmatprep.subr.mxu0 0.0
  %269 = vmatpush1.msra.mxu0 %v240
  %270 = vmatprep.subr.mxu0 0.0
  %271 = vmatpush1.msra.mxu0 %v241
  %272 = vmatprep.subr.mxu0 0.0
  %273 = vmatpush1.msra.mxu0 %v242
  %274 = vmatprep.subr.mxu0 0.0
  %275 = vmatpush1.msra.mxu0 %v243
  %276 = vmatprep.subr.mxu0 0.0
  %277 = vmatpush1.msra.mxu0 0.0
  %278 = vmatprep.subr.mxu0 0.0
  %279 = vmatpush1.msra.mxu0 0.0
  %280 = vmatprep.subr.mxu0 0.0
  %281 = vmatpush1.msra.mxu0 0.0
  %282 = vmatprep.subr.mxu0 0.0
  %283 = vmatpush1.msra.mxu0 0.0
  %284 = vmatprep.subr.mxu0 0.0
  %285 = vmatpush1.msra.mxu0 0.0
  %286 = vmatprep.subr.mxu0 0.0
  %287 = vmatpush1.msra.mxu0 0.0
  %288 = vmatprep.subr.mxu0 0.0
  %289 = vmatpush1.msra.mxu0 0.0
  %290 = vmatprep.subr.mxu0 0.0
  %291 = vmatpush1.msra.mxu0 0.0
  %292 = vmatprep.subr.mxu0 0.0
  %293 = vmatpush1.msra.mxu0 0.0
  %294 = vmatprep.subr.mxu0 0.0
  %295 = vmatpush1.msra.mxu0 0.0
  %296 = vmatprep.subr.mxu0 0.0
  %297 = vmatpush1.msra.mxu0 0.0
  %298 = vmatprep.subr.mxu0 0.0
  %299 = vmatpush1.msra.mxu0 0.0
  %300 = vmatprep.subr.mxu0 0.0
  %301 = vmatpush1.msra.mxu0 0.0
  %302 = vmatprep.subr.mxu0 0.0
  %303 = vmatpush1.msra.mxu0 0.0
  %304 = vmatprep.subr.mxu0 0.0
  %305 = vmatpush1.msra.mxu0 0.0
  %306 = vmatprep.subr.mxu0 0.0
  %307 = vmatpush1.msra.mxu0 0.0
  %308 = vmatprep.mubr.f32.mxu0 0.0
  %309 = vmatmul.mubr.f32.gmra.mrb[0].mxu0 %v212
  %v310 = vpop.f32.mrb[0].mxu0
  %v311 = vadd.f32 0.0, %v310
  %v312 = vpop.f32.mrb[0].mxu0
  %313 = vmatprep.mubr.f32.mxu0 0.0
  %314 = vmatmul.mubr.f32.gmra.mrb[0].mxu0 %v213
  %v315 = vpop.f32.mrb[0].mxu0
  %v316 = vadd.f32 0.0, %v315
  %v317 = vpop.f32.mrb[0].mxu0
  %318 = vmatprep.mubr.f32.mxu0 0.0
  %319 = vmatmul.mubr.f32.gmra.mrb[0].mxu0 %v214
  %v320 = vpop.f32.mrb[0].mxu0
  %v321 = vadd.f32 0.0, %v320
  %v322 = vpop.f32.mrb[0].mxu0
  %323 = vmatprep.mubr.f32.mxu0 0.0
  %324 = vmatmul.mubr.f32.gmra.mrb[0].mxu0 %v215
  %v325 = vpop.f32.mrb[0].mxu0
  %v326 = vadd.f32 0.0, %v325
  %v327 = vpop.f32.mrb[0].mxu0
  %328 = vmatprep.mubr.f32.mxu0 0.0
  %329 = vmatmul.mubr.f32.gmra.mrb[0].mxu0 %v216
  %v330 = vpop.f32.mrb[0].mxu0
  %v331 = vadd.f32 0.0, %v330
  %v332 = vpop.f32.mrb[0].mxu0
  %333 = vmatprep.mubr.f32.mxu0 0.0
  %334 = vmatmul.mubr.f32.gmra.mrb[0].mxu0 %v217
  %v335 = vpop.f32.mrb[0].mxu0
  %v336 = vadd.f32 0.0, %v335
  %v337 = vpop.f32.mrb[0].mxu0
  %338 = vmatprep.mubr.f32.mxu0 0.0
  %339 = vmatmul.mubr.f32.gmra.mrb[0].mxu0 %v218
  %v340 = vpop.f32.mrb[0].mxu0
  %v341 = vadd.f32 0.0, %v340
  %v342 = vpop.f32.mrb[0].mxu0
  %343 = vmatprep.mubr.f32.mxu0 0.0
  %344 = vmatmul.mubr.f32.gmra.mrb[0].mxu0 %v219
  %v345 = vpop.f32.mrb[0].mxu0
  %v346 = vadd.f32 0.0, %v345
  %v347 = vpop.f32.mrb[0].mxu0
  %348 = vmatprep.mubr.f32.mxu0 0.0
  %349 = vmatmul.mubr.f32.gmra.mrb[0].mxu0 %v220
  %v350 = vpop.f32.mrb[0].mxu0
  %v351 = vadd.f32 0.0, %v350
  %v352 = vpop.f32.mrb[0].mxu0
  %353 = vmatprep.mubr.f32.mxu0 0.0
  %354 = vmatmul.mubr.f32.gmra.mrb[0].mxu0 %v221
  %v355 = vpop.f32.mrb[0].mxu0
  %v356 = vadd.f32 0.0, %v355
  %v357 = vpop.f32.mrb[0].mxu0
  %358 = vmatprep.mubr.f32.mxu0 0.0
  %359 = vmatmul.mubr.f32.gmra.mrb[0].mxu0 %v222
  %v360 = vpop.f32.mrb[0].mxu0
  %v361 = vadd.f32 0.0, %v360
  %v362 = vpop.f32.mrb[0].mxu0
  %363 = vmatprep.mubr.f32.mxu0 0.0
  %364 = vmatmul.mubr.f32.gmra.mrb[0].mxu0 %v223
  %v365 = vpop.f32.mrb[0].mxu0
  %v366 = vadd.f32 0.0, %v365
  %v367 = vpop.f32.mrb[0].mxu0
  %368 = vmatprep.mubr.f32.mxu0 0.0
  %369 = vmatmul.mubr.f32.gmra.mrb[0].mxu0 %v224
  %v370 = vpop.f32.mrb[0].mxu0
  %v371 = vadd.f32 0.0, %v370
  %v372 = vpop.f32.mrb[0].mxu0
  %373 = vmatprep.mubr.f32.mxu0 0.0
  %374 = vmatmul.mubr.f32.gmra.mrb[0].mxu0 %v225
  %v375 = vpop.f32.mrb[0].mxu0
  %v376 = vadd.f32 0.0, %v375
  %v377 = vpop.f32.mrb[0].mxu0
  %378 = vmatprep.mubr.f32.mxu0 0.0
  %379 = vmatmul.mubr.f32.gmra.mrb[0].mxu0 %v226
  %v380 = vpop.f32.mrb[0].mxu0
  %v381 = vadd.f32 0.0, %v380
  %v382 = vpop.f32.mrb[0].mxu0
  %383 = vmatprep.mubr.f32.mxu0 0.0
  %384 = vmatmul.mubr.f32.gmra.mrb[0].mxu0 %v227
  %v385 = vpop.f32.mrb[0].mxu0
  %v386 = vadd.f32 0.0, %v385
  %v387 = vpop.f32.mrb[0].mxu0
  %388 = vdwg.mxu0
  %389 = vst [vmem:[%s5] sm:$0xff] %v311
  %390 = vst [vmem:[%s5 + $0x8] sm:$0xff] %v316
  %391 = vst [vmem:[%s5 + $0x10] sm:$0xff] %v321
  %392 = vst [vmem:[%s5 + $0x18] sm:$0xff] %v326
  %393 = vst [vmem:[%s5 + $0x20] sm:$0xff] %v331
  %394 = vst [vmem:[%s5 + $0x28] sm:$0xff] %v336
  %395 = vst [vmem:[%s5 + $0x30] sm:$0xff] %v341
  %396 = vst [vmem:[%s5 + $0x38] sm:$0xff] %v346
  %397 = vst [vmem:[%s5 + $0x40] sm:$0xff] %v351
  %398 = vst [vmem:[%s5 + $0x48] sm:$0xff] %v356
  %399 = vst [vmem:[%s5 + $0x50] sm:$0xff] %v361
  %400 = vst [vmem:[%s5 + $0x58] sm:$0xff] %v366
  %401 = vst [vmem:[%s5 + $0x60] sm:$0xff] %v371
  %402 = vst [vmem:[%s5 + $0x68] sm:$0xff] %v376
  %403 = vst [vmem:[%s5 + $0x70] sm:$0xff] %v381
  %404 = vst [vmem:[%s5 + $0x78] sm:$0xff] %v386
  // Predicated region
  $region18: #{attention_head.4} parent=0 // pred_check
    _
  $region19: #{attention_head.4} parent=0 // pred_check_branch
    %406 = sbr.rel (0) target = $region21
  $region20: #{attention_head.4} parent=0 // pred_region
    _
  $region21: #{attention_head.4} parent=0 // pred_fallthru
    _
  // Predicated region
  $region22: #{attention_head.4} parent=0 // pred_check
    _
  $region23: #{attention_head.4} parent=0 // pred_check_branch
    %408 = sbr.rel (0) target = $region25
  $region24: #{attention_head.4} parent=0 // pred_region
    _
  $region25: #{attention_head.4} parent=0 // pred_fallthru
    _
  // Predicated region
  $region26: #{attention_head.4} parent=0 // pred_check
    _
  $region27: #{attention_head.4} parent=0 // pred_check_branch
    %410 = sbr.rel (0) target = $region29
  $region28: #{attention_head.4} parent=0 // pred_region
    _
  $region29: #{attention_head.4} parent=0 // pred_fallthru
    _
  // Predicated region
  $region30: #{attention_head.4} parent=0 // pred_check
    _
  $region31: #{attention_head.4} parent=0 // pred_check_branch
    %412 = sbr.rel (0) target = $region33
  $region32: #{attention_head.4} parent=0 // pred_region
    _
  $region33: #{attention_head.4} parent=0 // pred_fallthru
    _

// kernel: attention_head.5
$region0: #{attention_head.5}
  #allocation0 [shape = 'u32[]', space=smem, size = 0x4, offset = 0x4, fixed_abs, tag = 'smem constant byte address 0x4 - core index']
  #allocation1 [shape = 'u32[144,128]{1,0:T(1,128)}', space=vmem, size = 0x12000, scoped, tag = 'internal scratch']
  #allocation2 [shape = 'f32[8,1]{1,0:T(8,128)}', space=vmem, size = 0x1000, scoped, tag = 'scratch operand']
  #allocation3 [shape = 'f32[8,1]{1,0:T(8,128)}', space=vmem, size = 0x1000, scoped, tag = 'scratch operand']
  #allocation4 [shape = 'f32[8,128]{1,0:T(8,128)}', space=vmem, size = 0x1000, scoped, tag = 'scratch operand']
  %s0 = inlined_call_operand.vmem [shape: f32[8,128], index: 0, kind: input, shape index: {}]
  %s1 = inlined_call_operand.vmem [shape: f32[128,128], index: 1, kind: input, shape index: {}]
  %s2 = inlined_call_operand.vmem [shape: f32[128,128], index: 2, kind: input, shape index: {}]
  %s3 = inlined_call_operand.hbm [shape: f32[8,128], index: 3, kind: output, shape index: {}]
  %s4 = sld [smem:[#allocation0]]
  $region34: #{attention_head.5} parent=0
    _
  %s6 = ssub.s32 1, %s4
  %s7 = scalar_select 0, %s6, %s4
  $region1: #{attention_head.5} parent=0
    #allocation5 [shape = 'u8[4096]{0}', space=vmem, size = 0x1000, scoped, tag = 'output window, operand 0, single buffered']
    #allocation6 [shape = 's32[1]{0}', space=sflag, size = 0x4, scoped, tag = 'scoped memory for attention_head.5']
    %8 = vsyncpa [#allocation6], 0
    // Predicated region
    $region2: #{attention_head.5} parent=1 // pred_check
      _
    $region3: #{attention_head.5} parent=1 // pred_check_branch
      %10 = sbr.rel (0) target = $region5
    $region4: #{attention_head.5} parent=1 // pred_region
      _
    $region5: #{attention_head.5} parent=1 // pred_fallthru
      _
    // Predicated region
    $region6: #{attention_head.5} parent=1 // pred_check
      _
    $region7: #{attention_head.5} parent=1 // pred_check_branch
      %12 = sbr.rel (0) target = $region9
    $region8: #{attention_head.5} parent=1 // pred_region
      _
    $region9: #{attention_head.5} parent=1 // pred_fallthru
      _
    // Predicated region
    $region10: #{attention_head.5} parent=1 // pred_check
      _
    $region11: #{attention_head.5} parent=1 // pred_check_branch
      %14 = sbr.rel (0) target = $region13
    $region12: #{attention_head.5} parent=1 // pred_region
      _
    $region13: #{attention_head.5} parent=1 // pred_fallthru
      _
    %p15 = scmp.eq.s32.totalorder 0, 0
    // Predicated region
    $region14: #{attention_head.5} parent=1 // pred_check
      %p16 = pneg %p15
    $region15: #{attention_head.5} parent=1 // pred_check_branch
      %18 = sbr.rel (%p16) target = $region17
    $region16: #{attention_head.5} parent=1 // pred_region
      %vm19 = vcmask 7168
      %20 = vst.msk [vmem:[#allocation2] sm:$0xff] %vm19, -inf
      %21 = vst.msk [vmem:[#allocation3] sm:$0xff] %vm19, 0.0
      %22 = vst [vmem:[#allocation4] sm:$0xff] 0.0
    $region17: #{attention_head.5} parent=1 // pred_fallthru
      _
    %v23 = vld [vmem:[%s0] sm:$0xff]
    %v24 = vld [vmem:[%s1] sm:$0xff]
    %v25 = vld [vmem:[%s1 + $0x8] sm:$0xff]
    %v26 = vld [vmem:[%s1 + $0x10] sm:$0xff]
    %v27 = vld [vmem:[%s1 + $0x18] sm:$0xff]
    %v28 = vld [vmem:[%s1 + $0x20] sm:$0xff]
    %v29 = vld [vmem:[%s1 + $0x28] sm:$0xff]
    %v30 = vld [vmem:[%s1 + $0x30] sm:$0xff]
    %v31 = vld [vmem:[%s1 + $0x38] sm:$0xff]
    %v32 = vld [vmem:[%s1 + $0x40] sm:$0xff]
    %v33 = vld [vmem:[%s1 + $0x48] sm:$0xff]
    %v34 = vld [vmem:[%s1 + $0x50] sm:$0xff]
    %v35 = vld [vmem:[%s1 + $0x58] sm:$0xff]
    %v36 = vld [vmem:[%s1 + $0x60] sm:$0xff]
    %v37 = vld [vmem:[%s1 + $0x68] sm:$0xff]
    %v38 = vld [vmem:[%s1 + $0x70] sm:$0xff]
    %v39 = vld [vmem:[%s1 + $0x78] sm:$0xff]
    %40 = vmatprep.subr.mxu0 0.0
    %41 = vmatpush1.xpose.msra.mxu0 %v24
    %42 = vmatprep.subr.mxu0 0.0
    %43 = vmatpush1.xpose.msra.mxu0 %v25
    %44 = vmatprep.subr.mxu0 0.0
    %45 = vmatpush1.xpose.msra.mxu0 %v26
    %46 = vmatprep.subr.mxu0 0.0
    %47 = vmatpush1.xpose.msra.mxu0 %v27
    %48 = vmatprep.subr.mxu0 0.0
    %49 = vmatpush1.xpose.msra.mxu0 %v28
    %50 = vmatprep.subr.mxu0 0.0
    %51 = vmatpush1.xpose.msra.mxu0 %v29
    %52 = vmatprep.subr.mxu0 0.0
    %53 = vmatpush1.xpose.msra.mxu0 %v30
    %54 = vmatprep.subr.mxu0 0.0
    %55 = vmatpush1.xpose.msra.mxu0 %v31
    %56 = vmatprep.subr.mxu0 0.0
    %57 = vmatpush1.xpose.msra.mxu0 %v32
    %58 = vmatprep.subr.mxu0 0.0
    %59 = vmatpush1.xpose.msra.mxu0 %v33
    %60 = vmatprep.subr.mxu0 0.0
    %61 = vmatpush1.xpose.msra.mxu0 %v34
    %62 = vmatprep.subr.mxu0 0.0
    %63 = vmatpush1.xpose.msra.mxu0 %v35
    %64 = vmatprep.subr.mxu0 0.0
    %65 = vmatpush1.xpose.msra.mxu0 %v36
    %66 = vmatprep.subr.mxu0 0.0
    %67 = vmatpush1.xpose.msra.mxu0 %v37
    %68 = vmatprep.subr.mxu0 0.0
    %69 = vmatpush1.xpose.msra.mxu0 %v38
    %70 = vmatprep.subr.mxu0 0.0
    %71 = vmatpush1.xpose.msra.mxu0 %v39
    %72 = vmatprep.subr.mxu0 0.0
    %73 = vmatpush1.xpose.msra.mxu0 0.0
    %74 = vmatprep.subr.mxu0 0.0
    %75 = vmatpush1.xpose.msra.mxu0 0.0
    %76 = vmatprep.subr.mxu0 0.0
    %77 = vmatpush1.xpose.msra.mxu0 0.0
    %78 = vmatprep.subr.mxu0 0.0
    %79 = vmatpush1.xpose.msra.mxu0 0.0
    %80 = vmatprep.subr.mxu0 0.0
    %81 = vmatpush1.xpose.msra.mxu0 0.0
    %82 = vmatprep.subr.mxu0 0.0
    %83 = vmatpush1.xpose.msra.mxu0 0.0
    %84 = vmatprep.subr.mxu0 0.0
    %85 = vmatpush1.xpose.msra.mxu0 0.0
    %86 = vmatprep.subr.mxu0 0.0
    %87 = vmatpush1.xpose.msra.mxu0 0.0
    %88 = vmatprep.subr.mxu0 0.0
    %89 = vmatpush1.xpose.msra.mxu0 0.0
    %90 = vmatprep.subr.mxu0 0.0
    %91 = vmatpush1.xpose.msra.mxu0 0.0
    %92 = vmatprep.subr.mxu0 0.0
    %93 = vmatpush1.xpose.msra.mxu0 0.0
    %94 = vmatprep.subr.mxu0 0.0
    %95 = vmatpush1.xpose.msra.mxu0 0.0
    %96 = vmatprep.subr.mxu0 0.0
    %97 = vmatpush1.xpose.msra.mxu0 0.0
    %98 = vmatprep.subr.mxu0 0.0
    %99 = vmatpush1.xpose.msra.mxu0 0.0
    %100 = vmatprep.subr.mxu0 0.0
    %101 = vmatpush1.xpose.msra.mxu0 0.0
    %102 = vmatprep.subr.mxu0 0.0
    %103 = vmatpush1.xpose.msra.mxu0 0.0
    %104 = vmatprep.mubr.f32.mxu0 0.0
    %105 = vmatmul.mubr.f32.gmra.mrb[0].mxu0 %v23
    %v106 = vpop.f32.mrb[0].mxu0
    %v107 = vadd.f32 0.0, %v106
    %v108 = vpop.f32.mrb[0].mxu0
    %109 = vdwg.mxu0
    %p110 = scmp.lt.s32.totalorder 0, 0
    // Predicated region
    $region18: #{attention_head.5} parent=1 // pred_check
      %p111 = pneg %p110
    $region19: #{attention_head.5} parent=1 // pred_check_branch
      %113 = sbr.rel (%p111) target = $region21
    $region20: #{attention_head.5} parent=1 // pred_region
      %v114 = vld [vmem:[#allocation2] sm:$0xff]
      %115 = vmax.xlane.f32.xlu0 %v107
      %v116 = vpop.xlane.xlu0 %115
      %v117 = vmax.f32 %v114, %v116
      %v118 = vsub.f32 %v114, %v117
      %v119 = vmul.f32 %v118, 1.442695
      %v120 = vpow.pop %v119
      %122 = vset.pattern.permute.xlu0 0
      %123 = vperm.xlu0 %122, %v117
      %v124 = vpop.permute.xlu0 %123
      %v126 = vsub.f32 %v107, %v124
      %v127 = vmul.f32 %v126, 1.442695
      %v128 = vpow.pop %v127
      %v129 = vld [vmem:[#allocation3] sm:$0xff]
      %v130 = vmul.f32 %v120, %v129
      %131 = vadd.xlane.f32.xlu0 %v128
      %v132 = vpop.xlane.xlu0 %131
      %v133 = vadd.f32 %v130, %v132
      %vm134 = vcmask 7168
      %135 = vst.msk [vmem:[#allocation3] sm:$0xff] %vm134, %v133
      %v136 = vld [vmem:[#allocation4] sm:$0xff]
      %138 = vset.pattern.permute.xlu0 0
      %139 = vperm.xlu0 %138, %v120
      %v140 = vpop.permute.xlu0 %139
      %v142 = vmul.f32 %v140, %v136
      %v143 = vld [vmem:[%s2] sm:$0xff]
      %v144 = vld [vmem:[%s2 + $0x8] sm:$0xff]
      %v145 = vld [vmem:[%s2 + $0x10] sm:$0xff]
      %v146 = vld [vmem:[%s2 + $0x18] sm:$0xff]
      %v147 = vld [vmem:[%s2 + $0x20] sm:$0xff]
      %v148 = vld [vmem:[%s2 + $0x28] sm:$0xff]
      %v149 = vld [vmem:[%s2 + $0x30] sm:$0xff]
      %v150 = vld [vmem:[%s2 + $0x38] sm:$0xff]
      %v151 = vld [vmem:[%s2 + $0x40] sm:$0xff]
      %v152 = vld [vmem:[%s2 + $0x48] sm:$0xff]
      %v153 = vld [vmem:[%s2 + $0x50] sm:$0xff]
      %v154 = vld [vmem:[%s2 + $0x58] sm:$0xff]
      %v155 = vld [vmem:[%s2 + $0x60] sm:$0xff]
      %v156 = vld [vmem:[%s2 + $0x68] sm:$0xff]
      %v157 = vld [vmem:[%s2 + $0x70] sm:$0xff]
      %v158 = vld [vmem:[%s2 + $0x78] sm:$0xff]
      %159 = vmatprep.subr.mxu0 0.0
      %160 = vmatpush1.msra.mxu0 %v143
      %161 = vmatprep.subr.mxu0 0.0
      %162 = vmatpush1.msra.mxu0 %v144
      %163 = vmatprep.subr.mxu0 0.0
      %164 = vmatpush1.msra.mxu0 %v145
      %165 = vmatprep.subr.mxu0 0.0
      %166 = vmatpush1.msra.mxu0 %v146
      %167 = vmatprep.subr.mxu0 0.0
      %168 = vmatpush1.msra.mxu0 %v147
      %169 = vmatprep.subr.mxu0 0.0
      %170 = vmatpush1.msra.mxu0 %v148
      %171 = vmatprep.subr.mxu0 0.0
      %172 = vmatpush1.msra.mxu0 %v149
      %173 = vmatprep.subr.mxu0 0.0
      %174 = vmatpush1.msra.mxu0 %v150
      %175 = vmatprep.subr.mxu0 0.0
      %176 = vmatpush1.msra.mxu0 %v151
      %177 = vmatprep.subr.mxu0 0.0
      %178 = vmatpush1.msra.mxu0 %v152
      %179 = vmatprep.subr.mxu0 0.0
      %180 = vmatpush1.msra.mxu0 %v153
      %181 = vmatprep.subr.mxu0 0.0
      %182 = vmatpush1.msra.mxu0 %v154
      %183 = vmatprep.subr.mxu0 0.0
      %184 = vmatpush1.msra.mxu0 %v155
      %185 = vmatprep.subr.mxu0 0.0
      %186 = vmatpush1.msra.mxu0 %v156
      %187 = vmatprep.subr.mxu0 0.0
      %188 = vmatpush1.msra.mxu0 %v157
      %189 = vmatprep.subr.mxu0 0.0
      %190 = vmatpush1.msra.mxu0 %v158
      %191 = vmatprep.subr.mxu0 0.0
      %192 = vmatpush1.msra.mxu0 0.0
      %193 = vmatprep.subr.mxu0 0.0
      %194 = vmatpush1.msra.mxu0 0.0
      %195 = vmatprep.subr.mxu0 0.0
      %196 = vmatpush1.msra.mxu0 0.0
      %197 = vmatprep.subr.mxu0 0.0
      %198 = vmatpush1.msra.mxu0 0.0
      %199 = vmatprep.subr.mxu0 0.0
      %200 = vmatpush1.msra.mxu0 0.0
      %201 = vmatprep.subr.mxu0 0.0
      %202 = vmatpush1.msra.mxu0 0.0
      %203 = vmatprep.subr.mxu0 0.0
      %204 = vmatpush1.msra.mxu0 0.0
      %205 = vmatprep.subr.mxu0 0.0
      %206 = vmatpush1.msra.mxu0 0.0
      %207 = vmatprep.subr.mxu0 0.0
      %208 = vmatpush1.msra.mxu0 0.0
      %209 = vmatprep.subr.mxu0 0.0
      %210 = vmatpush1.msra.mxu0 0.0
      %211 = vmatprep.subr.mxu0 0.0
      %212 = vmatpush1.msra.mxu0 0.0
      %213 = vmatprep.subr.mxu0 0.0
      %214 = vmatpush1.msra.mxu0 0.0
      %215 = vmatprep.subr.mxu0 0.0
      %216 = vmatpush1.msra.mxu0 0.0
      %217 = vmatprep.subr.mxu0 0.0
      %218 = vmatpush1.msra.mxu0 0.0
      %219 = vmatprep.subr.mxu0 0.0
      %220 = vmatpush1.msra.mxu0 0.0
      %221 = vmatprep.subr.mxu0 0.0
      %222 = vmatpush1.msra.mxu0 0.0
      %223 = vmatprep.mubr.f32.mxu0 0.0
      %224 = vmatmul.mubr.f32.gmra.mrb[0].mxu0 %v128
      %v225 = vpop.f32.mrb[0].mxu0
      %v226 = vadd.f32 0.0, %v225
      %v227 = vpop.f32.mrb[0].mxu0
      %228 = vdwg.mxu0
      %v229 = vadd.f32 %v142, %v226
      %230 = vst [vmem:[#allocation4] sm:$0xff] %v229
      %231 = vst.msk [vmem:[#allocation2] sm:$0xff] %vm134, %v117
    $region21: #{attention_head.5} parent=1 // pred_fallthru
      _
    // Predicated region
    $region22: #{attention_head.5} parent=1 // pred_check
      %p232 = pneg %p15
    $region23: #{attention_head.5} parent=1 // pred_check_branch
      %234 = sbr.rel (%p232) target = $region25
    $region24: #{attention_head.5} parent=1 // pred_region
      %s235 = smul.u32 0, 128
      %v236 = vlaneseq
      %v237 = vand.u32 %v236, 127
      %v238 = vstv %s235
      %v239 = vadd.s32 %v238, %v237
      %vm240 = vcmp.lt.s32.totalorder %v239, 8
      %v241 = vsel %vm240, %v107, -1e+30
      %v242 = vld [vmem:[#allocation2] sm:$0xff]
      %243 = vmax.xlane.f32.xlu0 %v241
      %v244 = vpop.xlane.xlu0 %243
      %v245 = vmax.f32 %v242, %v244
      %v246 = vsub.f32 %v242, %v245
      %v247 = vmul.f32 %v246, 1.442695
      %v248 = vpow.pop %v247
      %250 = vset.pattern.permute.xlu0 0
      %251 = vperm.xlu0 %250, %v245
      %v252 = vpop.permute.xlu0 %251
      %v254 = vsub.f32 %v241, %v252
      %v255 = vmul.f32 %v254, 1.442695
      %v256 = vpow.pop %v255
      %v257 = vld [vmem:[#allocation3] sm:$0xff]
      %v258 = vmul.f32 %v248, %v257
      %259 = vadd.xlane.f32.xlu0 %v256
      %v260 = vpop.xlane.xlu0 %259
      %v261 = vadd.f32 %v258, %v260
      %vm262 = vcmask 7168
      %263 = vst.msk [vmem:[#allocation3] sm:$0xff] %vm262, %v261
      %v264 = vld [vmem:[#allocation4] sm:$0xff]
      %266 = vset.pattern.permute.xlu0 0
      %267 = vperm.xlu0 %266, %v248
      %v268 = vpop.permute.xlu0 %267
      %v270 = vmul.f32 %v268, %v264
      %v271 = vld [vmem:[%s2] sm:$0xff]
      %v272 = vld [vmem:[%s2 + $0x8] sm:$0xff]
      %v273 = vld [vmem:[%s2 + $0x10] sm:$0xff]
      %v274 = vld [vmem:[%s2 + $0x18] sm:$0xff]
      %v275 = vld [vmem:[%s2 + $0x20] sm:$0xff]
      %v276 = vld [vmem:[%s2 + $0x28] sm:$0xff]
      %v277 = vld [vmem:[%s2 + $0x30] sm:$0xff]
      %v278 = vld [vmem:[%s2 + $0x38] sm:$0xff]
      %v279 = vld [vmem:[%s2 + $0x40] sm:$0xff]
      %v280 = vld [vmem:[%s2 + $0x48] sm:$0xff]
      %v281 = vld [vmem:[%s2 + $0x50] sm:$0xff]
      %v282 = vld [vmem:[%s2 + $0x58] sm:$0xff]
      %v283 = vld [vmem:[%s2 + $0x60] sm:$0xff]
      %v284 = vld [vmem:[%s2 + $0x68] sm:$0xff]
      %v285 = vld [vmem:[%s2 + $0x70] sm:$0xff]
      %v286 = vld [vmem:[%s2 + $0x78] sm:$0xff]
      %287 = vmatprep.subr.mxu0 0.0
      %288 = vmatpush1.msra.mxu0 %v271
      %289 = vmatprep.subr.mxu0 0.0
      %290 = vmatpush1.msra.mxu0 %v272
      %291 = vmatprep.subr.mxu0 0.0
      %292 = vmatpush1.msra.mxu0 %v273
      %293 = vmatprep.subr.mxu0 0.0
      %294 = vmatpush1.msra.mxu0 %v274
      %295 = vmatprep.subr.mxu0 0.0
      %296 = vmatpush1.msra.mxu0 %v275
      %297 = vmatprep.subr.mxu0 0.0
      %298 = vmatpush1.msra.mxu0 %v276
      %299 = vmatprep.subr.mxu0 0.0
      %300 = vmatpush1.msra.mxu0 %v277
      %301 = vmatprep.subr.mxu0 0.0
      %302 = vmatpush1.msra.mxu0 %v278
      %303 = vmatprep.subr.mxu0 0.0
      %304 = vmatpush1.msra.mxu0 %v279
      %305 = vmatprep.subr.mxu0 0.0
      %306 = vmatpush1.msra.mxu0 %v280
      %307 = vmatprep.subr.mxu0 0.0
      %308 = vmatpush1.msra.mxu0 %v281
      %309 = vmatprep.subr.mxu0 0.0
      %310 = vmatpush1.msra.mxu0 %v282
      %311 = vmatprep.subr.mxu0 0.0
      %312 = vmatpush1.msra.mxu0 %v283
      %313 = vmatprep.subr.mxu0 0.0
      %314 = vmatpush1.msra.mxu0 %v284
      %315 = vmatprep.subr.mxu0 0.0
      %316 = vmatpush1.msra.mxu0 %v285
      %317 = vmatprep.subr.mxu0 0.0
      %318 = vmatpush1.msra.mxu0 %v286
      %319 = vmatprep.subr.mxu0 0.0
      %320 = vmatpush1.msra.mxu0 0.0
      %321 = vmatprep.subr.mxu0 0.0
      %322 = vmatpush1.msra.mxu0 0.0
      %323 = vmatprep.subr.mxu0 0.0
      %324 = vmatpush1.msra.mxu0 0.0
      %325 = vmatprep.subr.mxu0 0.0
      %326 = vmatpush1.msra.mxu0 0.0
      %327 = vmatprep.subr.mxu0 0.0
      %328 = vmatpush1.msra.mxu0 0.0
      %329 = vmatprep.subr.mxu0 0.0
      %330 = vmatpush1.msra.mxu0 0.0
      %331 = vmatprep.subr.mxu0 0.0
      %332 = vmatpush1.msra.mxu0 0.0
      %333 = vmatprep.subr.mxu0 0.0
      %334 = vmatpush1.msra.mxu0 0.0
      %335 = vmatprep.subr.mxu0 0.0
      %336 = vmatpush1.msra.mxu0 0.0
      %337 = vmatprep.subr.mxu0 0.0
      %338 = vmatpush1.msra.mxu0 0.0
      %339 = vmatprep.subr.mxu0 0.0
      %340 = vmatpush1.msra.mxu0 0.0
      %341 = vmatprep.subr.mxu0 0.0
      %342 = vmatpush1.msra.mxu0 0.0
      %343 = vmatprep.subr.mxu0 0.0
      %344 = vmatpush1.msra.mxu0 0.0
      %345 = vmatprep.subr.mxu0 0.0
      %346 = vmatpush1.msra.mxu0 0.0
      %347 = vmatprep.subr.mxu0 0.0
      %348 = vmatpush1.msra.mxu0 0.0
      %349 = vmatprep.subr.mxu0 0.0
      %350 = vmatpush1.msra.mxu0 0.0
      %351 = vmatprep.mubr.f32.mxu0 0.0
      %352 = vmatmul.mubr.f32.gmra.mrb[0].mxu0 %v256
      %v353 = vpop.f32.mrb[0].mxu0
      %v354 = vadd.f32 0.0, %v353
      %v355 = vpop.f32.mrb[0].mxu0
      %356 = vdwg.mxu0
      %v357 = vadd.f32 %v270, %v354
      %358 = vst [vmem:[#allocation4] sm:$0xff] %v357
      %359 = vst.msk [vmem:[#allocation2] sm:$0xff] %vm262, %v245
      %v360 = vld [vmem:[#allocation3] sm:$0xff]
      %v361 = vrcp.pop %v360
      %v362 = vld [vmem:[#allocation4] sm:$0xff]
      %364 = vset.pattern.permute.xlu0 0
      %365 = vperm.xlu0 %364, %v361
      %v366 = vpop.permute.xlu0 %365
      %v368 = vmul.f32 %v362, %v366
      %369 = vst [vmem:[#allocation5] sm:$0xff] %v368
    $region25: #{attention_head.5} parent=1 // pred_fallthru
      _
    // Predicated region
    $region26: #{attention_head.5} parent=1 // pred_check
      _
    $region27: #{attention_head.5} parent=1 // pred_check_branch
      %371 = sbr.rel (0) target = $region29
    $region28: #{attention_head.5} parent=1 // pred_region
      %s373 = ssub.s32 128, 128
      %374 = vsyncadd [#allocation6], %s373
      %s376 = sshll.u32 [#allocation5], 4
      %s377 = int_to_ptr.vmem [resolvable:$true] %s376
      %379 = dma.vmem_to_hbm [thread:$0]  %s377, 128, %s3, [#allocation6]
    $region29: #{attention_head.5} parent=1 // pred_fallthru
      _
    // Predicated region
    $region30: #{attention_head.5} parent=1 // pred_check
      _
    $region31: #{attention_head.5} parent=1 // pred_check_branch
      %381 = sbr.rel (0) target = $region33
    $region32: #{attention_head.5} parent=1 // pred_region
      %382 = dma.done [#allocation6], 128
    $region33: #{attention_head.5} parent=1 // pred_fallthru
      _
    %383 = vsyncpa [#allocation6], 1

</llo_original>
